<compile_context>
chip_gen: v5e
topology: v5e:2x2
jax: 0.10.0
libtpu: 0.0.40
codegen_flags: <defaults>
</compile_context>

<pallas_src>
import functools

import numpy as np
import jax
import jax.numpy as jnp
from jax.experimental import pallas as pl
from jax.experimental.pallas import tpu as pltpu


# ----------------------------------------------------------------------------
# Kernel 1: isotonic (non-increasing, L2) fit of y = w - centered_sorted_neg via
#           the min-max formula  sol_i = min_{j<=i} max_{k>=i} mean(y[j..k])
# ----------------------------------------------------------------------------
def _isotonic_sol_kernel(cs_ref, csex_ref, sol_ref, seed_ref, *, n, reg):
    f32 = jnp.float32
    tj = csex_ref.shape[0]                       # rows (j) in this j-tile
    tk = cs_ref.shape[-1]                        # columns (k) in this k-block
    t = pl.program_id(0)                         # k-block step, processed right-to-left
    jg = pl.program_id(1)                        # j-tile index
    nk = pl.num_programs(0)

    NEG = f32(-jnp.inf)
    POS = f32(jnp.inf)

    j0 = jg * tj                                 # first global row of this j-tile
    bs = (nk - 1 - t) * tk                       # first global column of this k-block

    # Fresh k-block: (re)initialize the resident output block (running min over j-tiles).
    @pl.when(jg == 0)
    def _init_out():
        sol_ref[...] = jnp.full(sol_ref.shape, POS, sol_ref.dtype)

    # Rightmost k-block of the sweep: reset this j-tile's carried suffix-max seed.
    @pl.when(t == 0)
    def _init_seed():
        seed_ref[jg] = jnp.full((tj, 1), NEG, seed_ref.dtype)

    # Skip k-blocks entirely left of this j-tile (every entry has k < j: dead triangle).
    @pl.when(bs + tk > j0)
    def _compute():
        llane = jax.lax.broadcasted_iota(jnp.int32, (1, tk), 1)          # local column
        lane = llane + bs                                                # global column k
        row = jax.lax.broadcasted_iota(jnp.int32, (tj, 1), 0) + j0       # global row j
        lane_f = lane.astype(f32)
        row_f = row.astype(f32)

        # mean(w[j..k]) with w_t = (n - t)/reg  ->  (2n - j - k) / (2*reg)   (exact closed form)
        w_mean = (f32(2 * n) - row_f - lane_f) * f32(0.5 / reg)
        # mean(centered_sorted_neg[j..k]) = (CS[k] - CSex[j]) / (k - j + 1); reciprocal on EUP.
        seg_len = jnp.maximum(lane_f - row_f + f32(1.0), f32(1.0))
        sn_mean = (cs_ref[...] - csex_ref[...]) * pl.reciprocal(seg_len, approx=True)

        # A[j,k] = mean(y[j..k]).  Entries with k < j are finite garbage that is never
        # consulted (masked out of the min; seed entries they reach only belong to rows
        # that are masked at every block further left).
        a = w_mean - sn_mean

        # In-block suffix max along lanes (log-doubling XLU rolls, confined to tk lanes).
        s = 1
        while s < tk:
            shifted = pltpu.roll(a, shift=tk - s, axis=1)    # shifted[., i] = a[., (i+s) % tk]
            a = jnp.maximum(a, jnp.where(llane + s < tk, shifted, NEG))
            s *= 2

        # Fold in the carried max over all k-blocks to the right of this one.
        smax = jnp.maximum(a, seed_ref[jg])                  # S[j,i] = max_{k>=i} A[j,k]
        seed_ref[jg] = jnp.max(smax, axis=-1, keepdims=True)  # = max_{k>=bs} A[j,k] (next seed)

        # This j-tile's contribution to sol_i = min_{j<=i} S[j,i].
        tile_min = jnp.min(jnp.where(row <= lane, smax, POS), axis=0, keepdims=True)
        sol_ref[...] = jnp.minimum(sol_ref[...], tile_min)


# ----------------------------------------------------------------------------
# Kernel 2: tiny single-shot finalize — soft sort values, dist/plain losses,
#           reductions, packed into one lane-dense (1, 128) output.
# ----------------------------------------------------------------------------
def _loss_finalize_kernel(sol_ref, wmu_ref, theo_ref, inp_ref, tar_ref, out_ref,
                          *, loss_weight, size_average, loss_fn):
    f32 = jnp.float32
    n = sol_ref.shape[-1]

    soft_sorted = sol_ref[...] - wmu_ref[...]                # (1, n) ascending soft sort of inp

    if loss_fn == "L1":
        err = lambda u, v: jnp.abs(u - v)
    else:  # "L2"
        err = lambda u, v: (u - v) * (u - v)

    dist = err(soft_sorted, theo_ref[...])                   # (1, n)
    plain = err(inp_ref[...], tar_ref[...])                  # (1, n)
    total = f32(loss_weight) * dist + plain

    scale = f32(1.0 / n) if size_average else f32(1.0)
    tval = jnp.sum(total, keepdims=True) * scale             # (1, 1)
    dval = jnp.sum(dist, keepdims=True) * scale
    pval = jnp.sum(plain, keepdims=True) * scale

    olane = jax.lax.broadcasted_iota(jnp.int32, out_ref.shape, 1)
    out_ref[...] = jnp.where(olane == 0, tval,
                   jnp.where(olane == 1, dval,
                   jnp.where(olane == 2, pval, f32(0.0))))


# ----------------------------------------------------------------------------
# Wrapper (glue: hard sort + prefix sums feeding the kernels)
# ----------------------------------------------------------------------------
def _pick_tile(n, cap=512):
    t = min(n, cap)
    while n % t:
        t -= 128
    return t


def dist_loss(inp, tar, theoretical_labels, *, loss_weight=1.0,
              regularization_strength=0.1, size_average=True, loss_fn="L1",
              tile_j=None, tile_k=None):
    """DistLoss forward: returns (total, dist, plain) (means if size_average else sums)."""
    if loss_fn not in ("L1", "L2"):
        raise ValueError("loss_fn must be 'L1' or 'L2' (custom nn.Module losses unsupported)")
    n = inp.size
    assert n >= 128 and n % 128 == 0, "kernel assumes N is a multiple of 128 (lane width)"

    x_row = inp.reshape(1, n).astype(jnp.float32)
    tar_row = tar.reshape(1, n).astype(jnp.float32)
    theo_row = theoretical_labels.reshape(1, n).astype(jnp.float32)

    # TODO(synk): the hard sort inside soft_sort has no Pallas TPU primitive; it and the O(N)
    # prefix sums of the (centered) sorted values stay in the XLA wrapper as glue.
    sorted_neg = -jnp.sort(x_row.reshape(-1))                # = sort(-inp, descending)
    mu = jnp.mean(sorted_neg)
    centered = sorted_neg - mu                               # centering tames f32 cumsum error
    cs = jnp.cumsum(centered)
    cs_row = cs.reshape(1, n)                                # inclusive prefix sums
    csex_col = (cs - centered).reshape(n, 1)                 # exclusive prefix sums, column layout

    # Tile sizes: ~6 live (tile_j, tile_k) f32 temporaries stay well under the scoped-VMEM
    # budget on every generation; tile_k <= 512 keeps the rolls within a few vregs.
    tj = tile_j if tile_j is not None else _pick_tile(n, 512)
    tk = tile_k if tile_k is not None else _pick_tile(n, 512)
    assert n % tj == 0 and n % tk == 0 and tj % 128 == 0 and tk % 128 == 0
    nj, nk = n // tj, n // tk

    sol_kernel = functools.partial(_isotonic_sol_kernel, n=n,
                                   reg=float(regularization_strength))
    sol = pl.pallas_call(
        sol_kernel,
        out_shape=jax.ShapeDtypeStruct((1, n), jnp.float32),
        grid_spec=pltpu.PrefetchScalarGridSpec(
            num_scalar_prefetch=0,
            grid=(nk, nj),                                   # (k-blocks right-to-left, j-tiles)
            in_specs=[
                pl.BlockSpec((1, tk), lambda t, jg: (0, nk - 1 - t)),    # CS   (inclusive)
                pl.BlockSpec((tj, 1), lambda t, jg: (jg, 0)),            # CSex (exclusive)
            ],
            out_specs=pl.BlockSpec((1, tk), lambda t, jg: (0, nk - 1 - t)),
            scratch_shapes=[pltpu.VMEM((nj, tj, 1), jnp.float32)],       # per-row suffix-max seeds
        ),
        # TODO(synk): on v7x a leading "parallel" axis could split j-tiles across the two
        # TensorCores with per-core partial mins; single-core grid here.
        compiler_params=pltpu.CompilerParams(
            dimension_semantics=("arbitrary", "arbitrary"),
            vmem_limit_bytes=32 * 1024 * 1024),
    )(cs_row, csex_col)

    # Fold mu into w so the finalize kernel needs no scalar input: soft_sort = sol - mu - w.
    k_idx = jnp.arange(n, dtype=jnp.float32)
    wmu_row = ((jnp.float32(n) - k_idx) / jnp.float32(regularization_strength)
               + mu).reshape(1, n)

    fin_kernel = functools.partial(_loss_finalize_kernel,
                                   loss_weight=float(loss_weight),
                                   size_average=bool(size_average),
                                   loss_fn=loss_fn)
    out = pl.pallas_call(
        fin_kernel,
        out_shape=jax.ShapeDtypeStruct((1, 128), jnp.float32),
    )(sol, wmu_row, theo_row, x_row, tar_row)
    return out[0, 0], out[0, 1], out[0, 2]


# ----------------------------------------------------------------------------
# float64 numpy reference (exact PAV isotonic regression)
# ----------------------------------------------------------------------------
def _pav_non_increasing(y):
    vals, cnts = [], []
    for v in y:
        vals.append(float(v)); cnts.append(1)
        while len(vals) > 1 and vals[-2] < vals[-1]:
            v2, c2 = vals.pop(), cnts.pop()
            v1, c1 = vals.pop(), cnts.pop()
            vals.append((v1 * c1 + v2 * c2) / (c1 + c2)); cnts.append(c1 + c2)
    return np.concatenate([np.full(c, v) for v, c in zip(vals, cnts)])


def _reference(inp, tar, theo, reg=0.1, lw=1.0, loss_fn="L1", size_average=True):
    x = np.asarray(inp, np.float64).reshape(-1)
    n = x.size
    w = (np.arange(n, dtype=np.float64)[::-1] + 1.0) / reg
    sorted_neg = np.sort(-x)[::-1]                           # sort(-x, descending)
    sol = _pav_non_increasing(w - sorted_neg)
    soft_sorted = sol - w
    err = (lambda a, b: np.abs(a - b)) if loss_fn == "L1" else (lambda a, b: (a - b) ** 2)
    dist = err(soft_sorted, np.asarray(theo, np.float64).reshape(-1))
    plain = err(np.asarray(inp, np.float64).reshape(-1), np.asarray(tar, np.float64).reshape(-1))
    total = lw * dist + plain
    red = np.mean if size_average else np.sum
    return float(red(total)), float(red(dist)), float(red(plain))


# ----------------------------------------------------------------------------
if __name__ == "__main__":
    key = jax.random.PRNGKey(0)
    k1, k2, k3 = jax.random.split(key, 3)
    N = 512
    inp = jax.random.normal(k1, (N, 1), dtype=jnp.float32)
    tar = jax.random.normal(k2, (N, 1), dtype=jnp.float32)
    # "theoretical_labels" from a KDE would be sorted values -> use sorted normals.
    theo = jnp.sort(jax.random.normal(k3, (N, 1), dtype=jnp.float32), axis=0)

    # Small tiles to exercise the multi-block (seed-carry / triangle-skip) path: grid (4, 4).
    total, dist_m, plain_m = dist_loss(
        inp, tar, theo, loss_weight=1.0, regularization_strength=0.1,
        size_average=True, loss_fn="L1", tile_j=128, tile_k=128)
    jax.block_until_ready(total)

    ref = _reference(np.asarray(inp), np.asarray(tar), np.asarray(theo),
                     reg=0.1, lw=1.0, loss_fn="L1", size_average=True)
    got = (float(total), float(dist_m), float(plain_m))
    for g, r in zip(got, ref):
        assert np.allclose(g, r, rtol=2e-2, atol=5e-2), (got, ref)

    # Also exercise the L2 / sum path (single-block tiles, looser tolerance for approx recip).
    total2, dist2, plain2 = dist_loss(
        inp, tar, theo, loss_weight=0.5, regularization_strength=0.1,
        size_average=False, loss_fn="L2")
    jax.block_until_ready(total2)
    ref2 = _reference(np.asarray(inp), np.asarray(tar), np.asarray(theo),
                      reg=0.1, lw=0.5, loss_fn="L2", size_average=False)
    got2 = (float(total2), float(dist2), float(plain2))
    for g, r in zip(got2, ref2):
        assert np.allclose(g, r, rtol=5e-2, atol=5e-1), (got2, ref2)

    print("KERNEL_OK")
</pallas_src>

<mosaic_0001>
module attributes {stable_mosaic.version = 11 : i64} {
  func.func @_isotonic_sol_kernel(%arg0: i32, %arg1: i32, %arg2: memref<1x128xf32, #tpu.memory_space<vmem>>, %arg3: memref<128x1xf32, #tpu.memory_space<vmem>>, %arg4: memref<1x128xf32, #tpu.memory_space<vmem>>, %arg5: memref<4x128x1xf32, #tpu.memory_space<vmem>>) attributes {dimension_semantics = [#tpu.dimension_semantics<arbitrary>, #tpu.dimension_semantics<arbitrary>], iteration_bounds = array<i64: 4, 4>, scalar_prefetch = 0 : i64, scratch_operands = 1 : i64, tpu.core_type = #tpu.core_type<tc>, window_params = [{transform_indices = @transform_0, window_bounds = array<i64: 1, 128>}, {transform_indices = @transform_1, window_bounds = array<i64: 128, 1>}, {transform_indices = @transform_2, window_bounds = array<i64: 1, 128>}]} {
    %c128_i32 = arith.constant 128 : i32
    %0 = arith.muli %arg1, %c128_i32 : i32
    %c3_i32 = arith.constant 3 : i32
    %1 = arith.subi %c3_i32, %arg0 : i32
    %c128_i32_0 = arith.constant 128 : i32
    %2 = arith.muli %1, %c128_i32_0 : i32
    %c0_i32 = arith.constant 0 : i32
    %3 = arith.cmpi eq, %arg1, %c0_i32 : i32
    %4 = arith.extui %3 : i1 to i32
    %cst = arith.constant 0x7F800000 : f32
    %c0_i32_1 = arith.constant 0 : i32
    %5 = arith.cmpi ne, %4, %c0_i32_1 : i32
    scf.if %5 {
      %13 = vector.broadcast %cst : f32 to vector<1x128xf32>
      %c0 = arith.constant 0 : index
      %c0_9 = arith.constant 0 : index
      %14 = vector.load %arg4[%c0, %c0_9] : memref<1x128xf32, #tpu.memory_space<vmem>>, vector<1x128xf32>
      tpu.vector_store %arg4[%c0, %c0_9], %13 {strides = array<i32>} : memref<1x128xf32, #tpu.memory_space<vmem>>, vector<1x128xf32>,
    } else {
    }
    %c0_i32_2 = arith.constant 0 : i32
    %6 = arith.cmpi eq, %arg0, %c0_i32_2 : i32
    %7 = arith.extui %6 : i1 to i32
    %cst_3 = arith.constant 0xFF800000 : f32
    %c0_i32_4 = arith.constant 0 : i32
    %8 = arith.cmpi ne, %7, %c0_i32_4 : i32
    scf.if %8 {
      %13 = vector.broadcast %cst_3 : f32 to vector<128x1xf32>
      %14 = arith.index_cast %arg1 : i32 to index
      %c0 = arith.constant 0 : index
      %c0_9 = arith.constant 0 : index
      %15 = vector.load %arg5[%14, %c0, %c0_9] : memref<4x128x1xf32, #tpu.memory_space<vmem>>, vector<1x128x1xf32>
      %16 = vector.shape_cast %15 : vector<1x128x1xf32> to vector<128x1xf32>
      %17 = vector.shape_cast %13 : vector<128x1xf32> to vector<1x128x1xf32>
      tpu.vector_store %arg5[%14, %c0, %c0_9], %17 {strides = array<i32>} : memref<4x128x1xf32, #tpu.memory_space<vmem>>, vector<1x128x1xf32>,
    } else {
    }
    %c128_i32_5 = arith.constant 128 : i32
    %9 = arith.addi %2, %c128_i32_5 : i32
    %10 = arith.cmpi sgt, %9, %0 : i32
    %11 = arith.extui %10 : i1 to i32
    %cst_6 = arith.constant 0xFF800000 : f32
    %cst_7 = arith.constant 0x7F800000 : f32
    %c0_i32_8 = arith.constant 0 : i32
    %12 = arith.cmpi ne, %11, %c0_i32_8 : i32
    scf.if %12 {
      %13 = tpu.iota {dimensions = array<i32: 1>} : vector<1x128xi32>
      %14 = vector.broadcast %2 : i32 to vector<1x128xi32>
      %15 = arith.addi %13, %14 : vector<1x128xi32>
      %16 = tpu.iota {dimensions = array<i32: 0>} : vector<128x1xi32>
      %17 = vector.broadcast %0 : i32 to vector<128x1xi32>
      %18 = arith.addi %16, %17 : vector<128x1xi32>
      %19 = arith.sitofp %15 : vector<1x128xi32> to vector<1x128xf32>
      %20 = arith.sitofp %18 : vector<128x1xi32> to vector<128x1xf32>
      %cst_9 = arith.constant 1.024000e+03 : f32
      %21 = vector.broadcast %cst_9 : f32 to vector<128x1xf32>
      %22 = arith.subf %21, %20 : vector<128x1xf32>
      %23 = vector.broadcast %22 : vector<128x1xf32> to vector<128x128xf32>
      %24 = vector.broadcast %19 : vector<1x128xf32> to vector<128x128xf32>
      %25 = arith.subf %23, %24 : vector<128x128xf32>
      %cst_10 = arith.constant 5.000000e+00 : f32
      %26 = vector.broadcast %cst_10 : f32 to vector<128x128xf32>
      %27 = arith.mulf %25, %26 : vector<128x128xf32>
      %28 = vector.broadcast %19 : vector<1x128xf32> to vector<128x128xf32>
      %29 = vector.broadcast %20 : vector<128x1xf32> to vector<128x128xf32>
      %30 = arith.subf %28, %29 : vector<128x128xf32>
      %cst_11 = arith.constant 1.000000e+00 : f32
      %31 = vector.broadcast %cst_11 : f32 to vector<128x128xf32>
      %32 = arith.addf %30, %31 : vector<128x128xf32>
      %cst_12 = arith.constant 1.000000e+00 : f32
      %33 = vector.broadcast %cst_12 : f32 to vector<128x128xf32>
      %34 = arith.maximumf %32, %33 : vector<128x128xf32>
      %c0 = arith.constant 0 : index
      %c0_13 = arith.constant 0 : index
      %35 = vector.load %arg2[%c0, %c0_13] : memref<1x128xf32, #tpu.memory_space<vmem>>, vector<1x128xf32>
      %c0_14 = arith.constant 0 : index
      %c0_15 = arith.constant 0 : index
      %36 = vector.load %arg3[%c0_14, %c0_15] : memref<128x1xf32, #tpu.memory_space<vmem>>, vector<128x1xf32>
      %37 = vector.broadcast %35 : vector<1x128xf32> to vector<128x128xf32>
      %38 = vector.broadcast %36 : vector<128x1xf32> to vector<128x128xf32>
      %39 = arith.subf %37, %38 : vector<128x128xf32>
      %40 = tpu.reciprocal %34 {approx = true} : vector<128x128xf32> -> vector<128x128xf32>
      %41 = arith.mulf %39, %40 : vector<128x128xf32>
      %42 = arith.subf %27, %41 : vector<128x128xf32>
      %c127_i32 = arith.constant 127 : i32
      %43 = tpu.dynamic_rotate %42 by %c127_i32 dim 1 : vector<128x128xf32>, i32 -> vector<128x128xf32>
      %c1_i32 = arith.constant 1 : i32
      %44 = vector.broadcast %c1_i32 : i32 to vector<1x128xi32>
      %45 = arith.addi %13, %44 : vector<1x128xi32>
      %c128_i32_16 = arith.constant 128 : i32
      %46 = vector.broadcast %c128_i32_16 : i32 to vector<1x128xi32>
      %47 = arith.cmpi slt, %45, %46 : vector<1x128xi32>
      %48 = vector.shape_cast %47 : vector<1x128xi1> to vector<1x128xi1>
      %49 = vector.broadcast %48 : vector<1x128xi1> to vector<128x128xi1>
      %50 = vector.broadcast %cst_6 : f32 to vector<128x128xf32>
      %51 = arith.select %49, %43, %50 : vector<128x128xi1>, vector<128x128xf32>
      %52 = arith.maximumf %42, %51 : vector<128x128xf32>
      %c126_i32 = arith.constant 126 : i32
      %53 = tpu.dynamic_rotate %52 by %c126_i32 dim 1 : vector<128x128xf32>, i32 -> vector<128x128xf32>
      %c2_i32 = arith.constant 2 : i32
      %54 = vector.broadcast %c2_i32 : i32 to vector<1x128xi32>
      %55 = arith.addi %13, %54 : vector<1x128xi32>
      %c128_i32_17 = arith.constant 128 : i32
      %56 = vector.broadcast %c128_i32_17 : i32 to vector<1x128xi32>
      %57 = arith.cmpi slt, %55, %56 : vector<1x128xi32>
      %58 = vector.shape_cast %57 : vector<1x128xi1> to vector<1x128xi1>
      %59 = vector.broadcast %58 : vector<1x128xi1> to vector<128x128xi1>
      %60 = vector.broadcast %cst_6 : f32 to vector<128x128xf32>
      %61 = arith.select %59, %53, %60 : vector<128x128xi1>, vector<128x128xf32>
      %62 = arith.maximumf %52, %61 : vector<128x128xf32>
      %c124_i32 = arith.constant 124 : i32
      %63 = tpu.dynamic_rotate %62 by %c124_i32 dim 1 : vector<128x128xf32>, i32 -> vector<128x128xf32>
      %c4_i32 = arith.constant 4 : i32
      %64 = vector.broadcast %c4_i32 : i32 to vector<1x128xi32>
      %65 = arith.addi %13, %64 : vector<1x128xi32>
      %c128_i32_18 = arith.constant 128 : i32
      %66 = vector.broadcast %c128_i32_18 : i32 to vector<1x128xi32>
      %67 = arith.cmpi slt, %65, %66 : vector<1x128xi32>
      %68 = vector.shape_cast %67 : vector<1x128xi1> to vector<1x128xi1>
      %69 = vector.broadcast %68 : vector<1x128xi1> to vector<128x128xi1>
      %70 = vector.broadcast %cst_6 : f32 to vector<128x128xf32>
      %71 = arith.select %69, %63, %70 : vector<128x128xi1>, vector<128x128xf32>
      %72 = arith.maximumf %62, %71 : vector<128x128xf32>
      %c120_i32 = arith.constant 120 : i32
      %73 = tpu.dynamic_rotate %72 by %c120_i32 dim 1 : vector<128x128xf32>, i32 -> vector<128x128xf32>
      %c8_i32 = arith.constant 8 : i32
      %74 = vector.broadcast %c8_i32 : i32 to vector<1x128xi32>
      %75 = arith.addi %13, %74 : vector<1x128xi32>
      %c128_i32_19 = arith.constant 128 : i32
      %76 = vector.broadcast %c128_i32_19 : i32 to vector<1x128xi32>
      %77 = arith.cmpi slt, %75, %76 : vector<1x128xi32>
      %78 = vector.shape_cast %77 : vector<1x128xi1> to vector<1x128xi1>
      %79 = vector.broadcast %78 : vector<1x128xi1> to vector<128x128xi1>
      %80 = vector.broadcast %cst_6 : f32 to vector<128x128xf32>
      %81 = arith.select %79, %73, %80 : vector<128x128xi1>, vector<128x128xf32>
      %82 = arith.maximumf %72, %81 : vector<128x128xf32>
      %c112_i32 = arith.constant 112 : i32
      %83 = tpu.dynamic_rotate %82 by %c112_i32 dim 1 : vector<128x128xf32>, i32 -> vector<128x128xf32>
      %c16_i32 = arith.constant 16 : i32
      %84 = vector.broadcast %c16_i32 : i32 to vector<1x128xi32>
      %85 = arith.addi %13, %84 : vector<1x128xi32>
      %c128_i32_20 = arith.constant 128 : i32
      %86 = vector.broadcast %c128_i32_20 : i32 to vector<1x128xi32>
      %87 = arith.cmpi slt, %85, %86 : vector<1x128xi32>
      %88 = vector.shape_cast %87 : vector<1x128xi1> to vector<1x128xi1>
      %89 = vector.broadcast %88 : vector<1x128xi1> to vector<128x128xi1>
      %90 = vector.broadcast %cst_6 : f32 to vector<128x128xf32>
      %91 = arith.select %89, %83, %90 : vector<128x128xi1>, vector<128x128xf32>
      %92 = arith.maximumf %82, %91 : vector<128x128xf32>
      %c96_i32 = arith.constant 96 : i32
      %93 = tpu.dynamic_rotate %92 by %c96_i32 dim 1 : vector<128x128xf32>, i32 -> vector<128x128xf32>
      %c32_i32 = arith.constant 32 : i32
      %94 = vector.broadcast %c32_i32 : i32 to vector<1x128xi32>
      %95 = arith.addi %13, %94 : vector<1x128xi32>
      %c128_i32_21 = arith.constant 128 : i32
      %96 = vector.broadcast %c128_i32_21 : i32 to vector<1x128xi32>
      %97 = arith.cmpi slt, %95, %96 : vector<1x128xi32>
      %98 = vector.shape_cast %97 : vector<1x128xi1> to vector<1x128xi1>
      %99 = vector.broadcast %98 : vector<1x128xi1> to vector<128x128xi1>
      %100 = vector.broadcast %cst_6 : f32 to vector<128x128xf32>
      %101 = arith.select %99, %93, %100 : vector<128x128xi1>, vector<128x128xf32>
      %102 = arith.maximumf %92, %101 : vector<128x128xf32>
      %c64_i32 = arith.constant 64 : i32
      %103 = tpu.dynamic_rotate %102 by %c64_i32 dim 1 : vector<128x128xf32>, i32 -> vector<128x128xf32>
      %c64_i32_22 = arith.constant 64 : i32
      %104 = vector.broadcast %c64_i32_22 : i32 to vector<1x128xi32>
      %105 = arith.addi %13, %104 : vector<1x128xi32>
      %c128_i32_23 = arith.constant 128 : i32
      %106 = vector.broadcast %c128_i32_23 : i32 to vector<1x128xi32>
      %107 = arith.cmpi slt, %105, %106 : vector<1x128xi32>
      %108 = vector.shape_cast %107 : vector<1x128xi1> to vector<1x128xi1>
      %109 = vector.broadcast %108 : vector<1x128xi1> to vector<128x128xi1>
      %110 = vector.broadcast %cst_6 : f32 to vector<128x128xf32>
      %111 = arith.select %109, %103, %110 : vector<128x128xi1>, vector<128x128xf32>
      %112 = arith.maximumf %102, %111 : vector<128x128xf32>
      %113 = arith.index_cast %arg1 : i32 to index
      %c0_24 = arith.constant 0 : index
      %c0_25 = arith.constant 0 : index
      %114 = vector.load %arg5[%113, %c0_24, %c0_25] : memref<4x128x1xf32, #tpu.memory_space<vmem>>, vector<1x128x1xf32>
      %115 = vector.shape_cast %114 : vector<1x128x1xf32> to vector<128x1xf32>
      %116 = vector.broadcast %115 : vector<128x1xf32> to vector<128x128xf32>
      %117 = arith.maximumf %112, %116 : vector<128x128xf32>
      %cst_26 = arith.constant dense<0xFF800000> : vector<128xf32>
      %118 = vector.multi_reduction <maximumf>, %117, %cst_26 [1] : vector<128x128xf32> to vector<128xf32>
      %119 = vector.shape_cast %118 : vector<128xf32> to vector<128x1xf32>
      %120 = arith.index_cast %arg1 : i32 to index
      %c0_27 = arith.constant 0 : index
      %c0_28 = arith.constant 0 : index
      %121 = vector.load %arg5[%120, %c0_27, %c0_28] : memref<4x128x1xf32, #tpu.memory_space<vmem>>, vector<1x128x1xf32>
      %122 = vector.shape_cast %121 : vector<1x128x1xf32> to vector<128x1xf32>
      %123 = vector.shape_cast %119 : vector<128x1xf32> to vector<1x128x1xf32>
      tpu.vector_store %arg5[%120, %c0_27, %c0_28], %123 {strides = array<i32>} : memref<4x128x1xf32, #tpu.memory_space<vmem>>, vector<1x128x1xf32>,
      %124 = vector.broadcast %18 : vector<128x1xi32> to vector<128x128xi32>
      %125 = vector.broadcast %15 : vector<1x128xi32> to vector<128x128xi32>
      %126 = arith.cmpi sle, %124, %125 : vector<128x128xi32>
      %127 = vector.broadcast %cst_7 : f32 to vector<128x128xf32>
      %128 = arith.select %126, %117, %127 : vector<128x128xi1>, vector<128x128xf32>
      %cst_29 = arith.constant dense<0x7F800000> : vector<128xf32>
      %129 = vector.multi_reduction <minimumf>, %128, %cst_29 [0] : vector<128x128xf32> to vector<128xf32>
      %130 = vector.shape_cast %129 : vector<128xf32> to vector<1x128xf32>
      %c0_30 = arith.constant 0 : index
      %c0_31 = arith.constant 0 : index
      %131 = vector.load %arg4[%c0_30, %c0_31] : memref<1x128xf32, #tpu.memory_space<vmem>>, vector<1x128xf32>
      %132 = arith.minimumf %131, %130 : vector<1x128xf32>
      %c0_32 = arith.constant 0 : index
      %c0_33 = arith.constant 0 : index
      %133 = vector.load %arg4[%c0_32, %c0_33] : memref<1x128xf32, #tpu.memory_space<vmem>>, vector<1x128xf32>
      tpu.vector_store %arg4[%c0_32, %c0_33], %132 {strides = array<i32>} : memref<1x128xf32, #tpu.memory_space<vmem>>, vector<1x128xf32>,
    } else {
    }
    return
  }
  func.func @transform_0(%arg0: i32, %arg1: i32) -> (i32, i32) {
    %c3_i32 = arith.constant 3 : i32
    %0 = arith.subi %c3_i32, %arg0 : i32
    %c0_i32 = arith.constant 0 : i32
    %c0_i32_0 = arith.constant 0 : i32
    return %c0_i32, %0 : i32, i32
  }
  func.func @transform_1(%arg0: i32, %arg1: i32) -> (i32, i32) {
    %c0_i32 = arith.constant 0 : i32
    %c0_i32_0 = arith.constant 0 : i32
    return %arg1, %c0_i32 : i32, i32
  }
  func.func @transform_2(%arg0: i32, %arg1: i32) -> (i32, i32) {
    %c3_i32 = arith.constant 3 : i32
    %0 = arith.subi %c3_i32, %arg0 : i32
    %c0_i32 = arith.constant 0 : i32
    %c0_i32_0 = arith.constant 0 : i32
    return %c0_i32, %0 : i32, i32
  }
}

</mosaic_0001>

<llo_original>
// kernel: tpu_custom_call.1
$region0: #{tpu_custom_call.1}
  #allocation0 [shape = 'u32[]', space=smem, size = 0x4, offset = 0x4, fixed_abs, tag = 'smem constant byte address 0x4 - core index']
  #allocation1 [shape = 'u32[72,128]{1,0:T(1,128)}', space=vmem, size = 0x9000, scoped, tag = 'internal scratch']
  #allocation2 [shape = 'f32[4,128,1]{2,1,0:T(8,128)}', space=vmem, size = 0x40000, scoped, tag = 'scratch operand']
  %s0 = inlined_call_operand.vmem [shape: f32[1,512], index: 0, kind: input, shape index: {}]
  %s1 = inlined_call_operand.vmem [shape: f32[512,1], index: 1, kind: input, shape index: {}]
  %s2 = inlined_call_operand.hbm [shape: f32[1,512], index: 2, kind: output, shape index: {}]
  %s3 = sld [smem:[#allocation0]]
  $region53: #{tpu_custom_call.1} parent=0
    _
  %s5 = ssub.s32 1, %s3
  %s6 = scalar_select 0, %s5, %s3
  $region1: #{tpu_custom_call.1} parent=0
    #allocation3 [shape = 'u8[1024]{0}', space=vmem, size = 0x400, scoped, tag = 'output window, operand 0']
    #allocation4 [shape = 's32[2]{0}', space=sflag, size = 0x8, scoped, tag = 'scoped memory for tpu_custom_call.1']
    %7 = vsyncpa [#allocation4], 0
    %s8 = scalar_lea.sflag [#allocation4], 1
    %9 = vsyncpa %s8, 0
    loop: start=0, step=1, limit=18
    $region2: #{tpu_custom_call.1} parent=1 // loop_pre_header
      _
    $region3: #{tpu_custom_call.1} parent=1 // loop_header
      %s11 = sphi 0, %s15
      %p12 = scmp.ge.s32.totalorder %s11, 18
      %s18 = sphi 0, %s30
      %s19 = sphi 0, %s26
      %s20 = sphi 0, %s18
      %s21 = sphi 0, %s19
      %s22 = sphi 0, %s20
      %s23 = sphi 0, %s21
      %s35 = sphi 0, %s37
      %s38 = sphi 0, %s35
      %s39 = sphi 0, %s38
      %s55 = sphi 0, %s39
      %s61 = sphi 0, %s63
      %s64 = sphi 0, %s61
      %s65 = sphi 0, %s64
      %s81 = sphi 0, %s65
      %s89 = sphi 0, %s91
      %s92 = sphi 0, %s89
      %s93 = sphi 0, %s92
      %s109 = sphi 0, %s93
    $region4: #{tpu_custom_call.1} parent=1 // loop_header_branch
      %14 = sbr.rel (%p12) target = $region8
    $region5: #{tpu_custom_call.1} parent=1 // loop_body
      %s16 = ssub.s32 %s11, 1
      %s17 = ssub.s32 %s11, 2
      %s24 = sadd.s32 1, %s19
      %p25 = scmp.ge.s32.totalorder %s24, 4
      %s26 = scalar_select %p25, 0, %s24
      %s27 = sadd.s32 1, %s18
      %s28 = scalar_select %p25, %s27, %s18
      %p29 = scmp.ge.s32.totalorder %s28, 4
      %s30 = scalar_select %p29, 0, %s28
      %s31 = ssub.s32 3, %s18
      %s32 = ssub.s32 3, %s30
      %s33 = ssub.s32 %s31, %s32
      %p34 = scmp.eq.s32.totalorder %s33, 0
      %s36 = sadd.s32 %s35, 1
      %s37 = scalar_select %p34, %s35, %s36
      %p40 = pneg %p34
      %p41 = scmp.eq.s32.totalorder %s11, 15
      %p42 = por %p40, %p41
      %p43 = scmp.ne.s32.totalorder %s35, %s38
      %p44 = scmp.eq.s32.totalorder %s11, 0
      %p45 = por %p43, %p44
      %p46 = scmp.ne.s32.totalorder %s35, %s38
      %p47 = scmp.eq.s32.totalorder %s16, 15
      %p48 = por %p46, %p47
      %p49 = scmp.ne.s32.totalorder %s38, %s39
      %p50 = scmp.eq.s32.totalorder %s16, 0
      %p51 = por %p49, %p50
      %p52 = scmp.ne.s32.totalorder %s38, %s39
      %p53 = scmp.eq.s32.totalorder %s17, 15
      %p54 = por %p52, %p53
      %p56 = scmp.ne.s32.totalorder %s39, %s55
      %p57 = scmp.eq.s32.totalorder %s17, 0
      %p58 = por %p56, %p57
      %s59 = ssub.s32 %s19, %s26
      %p60 = scmp.eq.s32.totalorder %s59, 0
      %s62 = sadd.s32 %s61, 1
      %s63 = scalar_select %p60, %s61, %s62
      %p66 = pneg %p60
      %p67 = scmp.eq.s32.totalorder %s11, 15
      %p68 = por %p66, %p67
      %p69 = scmp.ne.s32.totalorder %s61, %s64
      %p70 = scmp.eq.s32.totalorder %s11, 0
      %p71 = por %p69, %p70
      %p72 = scmp.ne.s32.totalorder %s61, %s64
      %p73 = scmp.eq.s32.totalorder %s16, 15
      %p74 = por %p72, %p73
      %p75 = scmp.ne.s32.totalorder %s64, %s65
      %p76 = scmp.eq.s32.totalorder %s16, 0
      %p77 = por %p75, %p76
      %p78 = scmp.ne.s32.totalorder %s64, %s65
      %p79 = scmp.eq.s32.totalorder %s17, 15
      %p80 = por %p78, %p79
      %p82 = scmp.ne.s32.totalorder %s65, %s81
      %p83 = scmp.eq.s32.totalorder %s17, 0
      %p84 = por %p82, %p83
      %s85 = ssub.s32 3, %s18
      %s86 = ssub.s32 3, %s30
      %s87 = ssub.s32 %s85, %s86
      %p88 = scmp.eq.s32.totalorder %s87, 0
      %s90 = sadd.s32 %s89, 1
      %s91 = scalar_select %p88, %s89, %s90
      %p94 = pneg %p88
      %p95 = scmp.eq.s32.totalorder %s11, 15
      %p96 = por %p94, %p95
      %p97 = scmp.ne.s32.totalorder %s89, %s92
      %p98 = scmp.eq.s32.totalorder %s11, 0
      %p99 = por %p97, %p98
      %p100 = scmp.ne.s32.totalorder %s89, %s92
      %p101 = scmp.eq.s32.totalorder %s16, 15
      %p102 = por %p100, %p101
      %p103 = scmp.ne.s32.totalorder %s92, %s93
      %p104 = scmp.eq.s32.totalorder %s16, 0
      %p105 = por %p103, %p104
      %p106 = scmp.ne.s32.totalorder %s92, %s93
      %p107 = scmp.eq.s32.totalorder %s17, 15
      %p108 = por %p106, %p107
      %p110 = scmp.ne.s32.totalorder %s93, %s109
      %p111 = scmp.eq.s32.totalorder %s17, 0
      %p112 = por %p110, %p111
      %p113 = scmp.le.s32.totalorder 1, %s11
      %p114 = scmp.lt.s32.totalorder %s11, 17
      %p115 = pnand %p113, %p114
      %p116 = pneg %p115
      // Predicated region
      $region9: #{tpu_custom_call.1} parent=5 // pred_check
        _
      $region10: #{tpu_custom_call.1} parent=5 // pred_check_branch
        %118 = sbr.rel (%p115) target = $region12
      $region11: #{tpu_custom_call.1} parent=5 // pred_region
        %s119 = ssub.s32 %s11, 1
      $region12: #{tpu_custom_call.1} parent=5 // pred_fallthru
        _
      %p120 = scmp.lt.s32.totalorder %s11, 16
      // Predicated region
      $region13: #{tpu_custom_call.1} parent=5 // pred_check
        %p121 = pneg %p120
      $region14: #{tpu_custom_call.1} parent=5 // pred_check_branch
        %123 = sbr.rel (%p121) target = $region16
      $region15: #{tpu_custom_call.1} parent=5 // pred_region
        // Predicated region
        $region17: #{tpu_custom_call.1} parent=15 // pred_check
          %p124 = pneg %p45
        $region18: #{tpu_custom_call.1} parent=15 // pred_check_branch
          %126 = sbr.rel (%p124) target = $region20
        $region19: #{tpu_custom_call.1} parent=15 // pred_region
          %s127 = ssub.s32 3, %s18
          %p128 = scmp.lt.s32.totalorder %s127, 3
          %s129 = scalar_select %p128, %s127, 3
          %s130 = scalar_lea.vmem %s0, %s129
          %s131 = ssub.s32 3, %s18
        $region20: #{tpu_custom_call.1} parent=15 // pred_fallthru
          _
        // Predicated region
        $region21: #{tpu_custom_call.1} parent=15 // pred_check
          %p132 = pneg %p71
        $region22: #{tpu_custom_call.1} parent=15 // pred_check_branch
          %134 = sbr.rel (%p132) target = $region24
        $region23: #{tpu_custom_call.1} parent=15 // pred_region
          %s135 = smul.u32 16, %s19
          %p136 = scmp.lt.s32.totalorder %s135, 63
          %s137 = scalar_select %p136, %s135, 63
          %s138 = smul.addr %s137, 8
          %s139 = scalar_lea.vmem %s1, %s138
          %s140 = smul.u32 16, %s19
        $region24: #{tpu_custom_call.1} parent=15 // pred_fallthru
          _
      $region16: #{tpu_custom_call.1} parent=5 // pred_fallthru
        _
      %p141 = scmp.le.s32.totalorder 1, %s11
      %p142 = scmp.lt.s32.totalorder %s11, 17
      %p143 = pnand %p141, %p142
      %p144 = pneg %p143
      // Predicated region
      $region25: #{tpu_custom_call.1} parent=5 // pred_check
        _
      $region26: #{tpu_custom_call.1} parent=5 // pred_check_branch
        %146 = sbr.rel (%p143) target = $region28
      $region27: #{tpu_custom_call.1} parent=5 // pred_region
        %s147 = ssub.s32 %s11, 1
        %s148 = ssub.s32 3, %s20
        %p149 = scmp.lt.s32.totalorder %s148, 3
        %s150 = scalar_select %p149, %s148, 3
        %s151 = scalar_lea.vmem %s0, %s150
        %p152 = pneg %p51
        %p153 = pneg %p48
        %s154 = smul.u32 16, %s21
        %p155 = scmp.lt.s32.totalorder %s154, 63
        %s156 = scalar_select %p155, %s154, 63
        %s157 = smul.addr %s156, 8
        %s158 = scalar_lea.vmem %s1, %s157
        %p159 = pneg %p77
        %p160 = pneg %p74
        %p161 = pneg %p105
        %p162 = pneg %p102
        %s163 = sand.u32 %s92, 1
        %s164 = scalar_lea.sflag [#allocation4], %s163
        %s165 = sand.u32 %s92, 1
        %s166 = scalar_lea.vmem [#allocation3], %s165
        %s167 = ssub.s32 3, %s20
        %p168 = scmp.lt.s32.totalorder %s167, 3
        %s169 = scalar_select %p168, %s167, 3
        %s170 = scalar_lea.vmem %s0, %s169
        %s171 = ssub.s32 3, %s20
        %s172 = smul.u32 16, %s21
        %p173 = scmp.lt.s32.totalorder %s172, 63
        %s174 = scalar_select %p173, %s172, 63
        %s175 = smul.addr %s174, 8
        %s176 = scalar_lea.vmem %s1, %s175
        %s177 = smul.u32 16, %s21
        %s178 = ssub.s32 3, %s20
        %s179 = smul.u32 %s21, 128
        %s180 = ssub.s32 3, %s20
        %s181 = smul.u32 %s180, 128
        %p182 = scmp.eq.s32.totalorder %s21, 0
        // Predicated region
        $region29: #{tpu_custom_call.1} parent=27 // pred_check
          %p183 = pneg %p182
        $region30: #{tpu_custom_call.1} parent=27 // pred_check_branch
          %185 = sbr.rel (%p183) target = $region32
        $region31: #{tpu_custom_call.1} parent=27 // pred_region
          %186 = vst [vmem:[%s166] sm:$0x1] inf
        $region32: #{tpu_custom_call.1} parent=27 // pred_fallthru
          _
        %p187 = scmp.eq.s32.totalorder %s20, 0
        // Predicated region
        $region33: #{tpu_custom_call.1} parent=27 // pred_check
          %p188 = pneg %p187
        $region34: #{tpu_custom_call.1} parent=27 // pred_check_branch
          %190 = sbr.rel (%p188) target = $region36
        $region35: #{tpu_custom_call.1} parent=27 // pred_region
          %s191 = scalar_lea.vmem [#allocation2], %s179
          %vm192 = vcmask 7168
          %193 = vst.msk [vmem:[%s191] sm:$0xff] %vm192, -inf
          %194 = vst.msk [vmem:[%s191 + $0x8] sm:$0xff] %vm192, -inf
          %195 = vst.msk [vmem:[%s191 + $0x10] sm:$0xff] %vm192, -inf
          %196 = vst.msk [vmem:[%s191 + $0x18] sm:$0xff] %vm192, -inf
          %197 = vst.msk [vmem:[%s191 + $0x20] sm:$0xff] %vm192, -inf
          %198 = vst.msk [vmem:[%s191 + $0x28] sm:$0xff] %vm192, -inf
          %199 = vst.msk [vmem:[%s191 + $0x30] sm:$0xff] %vm192, -inf
          %200 = vst.msk [vmem:[%s191 + $0x38] sm:$0xff] %vm192, -inf
          %201 = vst.msk [vmem:[%s191 + $0x40] sm:$0xff] %vm192, -inf
          %202 = vst.msk [vmem:[%s191 + $0x48] sm:$0xff] %vm192, -inf
          %203 = vst.msk [vmem:[%s191 + $0x50] sm:$0xff] %vm192, -inf
          %204 = vst.msk [vmem:[%s191 + $0x58] sm:$0xff] %vm192, -inf
          %205 = vst.msk [vmem:[%s191 + $0x60] sm:$0xff] %vm192, -inf
          %206 = vst.msk [vmem:[%s191 + $0x68] sm:$0xff] %vm192, -inf
          %207 = vst.msk [vmem:[%s191 + $0x70] sm:$0xff] %vm192, -inf
          %208 = vst.msk [vmem:[%s191 + $0x78] sm:$0xff] %vm192, -inf
        $region36: #{tpu_custom_call.1} parent=27 // pred_fallthru
          _
        %s209 = sadd.s32 %s181, 128
        %p210 = scmp.gt.s32.totalorder %s209, %s179
        // Predicated region
        $region37: #{tpu_custom_call.1} parent=27 // pred_check
          %p211 = pneg %p210
        $region38: #{tpu_custom_call.1} parent=27 // pred_check_branch
          %213 = sbr.rel (%p211) target = $region40
        $region39: #{tpu_custom_call.1} parent=27 // pred_region
          %v214 = vlaneseq
          %v215 = vand.u32 %v214, 127
          %v216 = vstv %s181
          %v217 = vadd.s32 %v215, %v216
          %v218 = vlaneseq
          %v219 = vshrl.u32 %v218, 7
          %v220 = vadd.s32 %v219, 8
          %v221 = vadd.s32 %v219, 16
          %v222 = vadd.s32 %v219, 24
          %v223 = vadd.s32 %v219, 32
          %v224 = vadd.s32 %v219, 40
          %v225 = vadd.s32 %v219, 48
          %v226 = vadd.s32 %v219, 56
          %v227 = vadd.s32 %v219, 64
          %v228 = vadd.s32 %v219, 72
          %v229 = vadd.s32 %v219, 80
          %v230 = vadd.s32 %v219, 88
          %v231 = vadd.s32 %v219, 96
          %v232 = vadd.s32 %v219, 104
          %v233 = vadd.s32 %v219, 112
          %v234 = vadd.s32 %v219, 120
          %v235 = vstv %s179
          %v236 = vadd.s32 %v219, %v235
          %v237 = vadd.s32 %v220, %v235
          %v238 = vadd.s32 %v221, %v235
          %v239 = vadd.s32 %v222, %v235
          %v240 = vadd.s32 %v223, %v235
          %v241 = vadd.s32 %v224, %v235
          %v242 = vadd.s32 %v225, %v235
          %v243 = vadd.s32 %v226, %v235
          %v244 = vadd.s32 %v227, %v235
          %v245 = vadd.s32 %v228, %v235
          %v246 = vadd.s32 %v229, %v235
          %v247 = vadd.s32 %v230, %v235
          %v248 = vadd.s32 %v231, %v235
          %v249 = vadd.s32 %v232, %v235
          %v250 = vadd.s32 %v233, %v235
          %v251 = vadd.s32 %v234, %v235
          %v252 = vcvt.s32.f32 %v217
          %v253 = vcvt.s32.f32 %v236
          %v254 = vcvt.s32.f32 %v237
          %v255 = vcvt.s32.f32 %v238
          %v256 = vcvt.s32.f32 %v239
          %v257 = vcvt.s32.f32 %v240
          %v258 = vcvt.s32.f32 %v241
          %v259 = vcvt.s32.f32 %v242
          %v260 = vcvt.s32.f32 %v243
          %v261 = vcvt.s32.f32 %v244
          %v262 = vcvt.s32.f32 %v245
          %v263 = vcvt.s32.f32 %v246
          %v264 = vcvt.s32.f32 %v247
          %v265 = vcvt.s32.f32 %v248
          %v266 = vcvt.s32.f32 %v249
          %v267 = vcvt.s32.f32 %v250
          %v268 = vcvt.s32.f32 %v251
          %v269 = vsub.f32 1024.0, %v253
          %v270 = vsub.f32 1024.0, %v254
          %v271 = vsub.f32 1024.0, %v255
          %v272 = vsub.f32 1024.0, %v256
          %v273 = vsub.f32 1024.0, %v257
          %v274 = vsub.f32 1024.0, %v258
          %v275 = vsub.f32 1024.0, %v259
          %v276 = vsub.f32 1024.0, %v260
          %v277 = vsub.f32 1024.0, %v261
          %v278 = vsub.f32 1024.0, %v262
          %v279 = vsub.f32 1024.0, %v263
          %v280 = vsub.f32 1024.0, %v264
          %v281 = vsub.f32 1024.0, %v265
          %v282 = vsub.f32 1024.0, %v266
          %v283 = vsub.f32 1024.0, %v267
          %v284 = vsub.f32 1024.0, %v268
          %v285 = vsub.f32 %v269, %v252
          %v286 = vsub.f32 %v270, %v252
          %v287 = vsub.f32 %v271, %v252
          %v288 = vsub.f32 %v272, %v252
          %v289 = vsub.f32 %v273, %v252
          %v290 = vsub.f32 %v274, %v252
          %v291 = vsub.f32 %v275, %v252
          %v292 = vsub.f32 %v276, %v252
          %v293 = vsub.f32 %v277, %v252
          %v294 = vsub.f32 %v278, %v252
          %v295 = vsub.f32 %v279, %v252
          %v296 = vsub.f32 %v280, %v252
          %v297 = vsub.f32 %v281, %v252
          %v298 = vsub.f32 %v282, %v252
          %v299 = vsub.f32 %v283, %v252
          %v300 = vsub.f32 %v284, %v252
          %v301 = vmul.f32 %v285, 5.0
          %v302 = vmul.f32 %v286, 5.0
          %v303 = vmul.f32 %v287, 5.0
          %v304 = vmul.f32 %v288, 5.0
          %v305 = vmul.f32 %v289, 5.0
          %v306 = vmul.f32 %v290, 5.0
          %v307 = vmul.f32 %v291, 5.0
          %v308 = vmul.f32 %v292, 5.0
          %v309 = vmul.f32 %v293, 5.0
          %v310 = vmul.f32 %v294, 5.0
          %v311 = vmul.f32 %v295, 5.0
          %v312 = vmul.f32 %v296, 5.0
          %v313 = vmul.f32 %v297, 5.0
          %v314 = vmul.f32 %v298, 5.0
          %v315 = vmul.f32 %v299, 5.0
          %v316 = vmul.f32 %v300, 5.0
          %v317 = vsub.f32 %v252, %v253
          %v318 = vsub.f32 %v252, %v254
          %v319 = vsub.f32 %v252, %v255
          %v320 = vsub.f32 %v252, %v256
          %v321 = vsub.f32 %v252, %v257
          %v322 = vsub.f32 %v252, %v258
          %v323 = vsub.f32 %v252, %v259
          %v324 = vsub.f32 %v252, %v260
          %v325 = vsub.f32 %v252, %v261
          %v326 = vsub.f32 %v252, %v262
          %v327 = vsub.f32 %v252, %v263
          %v328 = vsub.f32 %v252, %v264
          %v329 = vsub.f32 %v252, %v265
          %v330 = vsub.f32 %v252, %v266
          %v331 = vsub.f32 %v252, %v267
          %v332 = vsub.f32 %v252, %v268
          %v333 = vadd.f32 %v317, 1.0
          %v334 = vadd.f32 %v318, 1.0
          %v335 = vadd.f32 %v319, 1.0
          %v336 = vadd.f32 %v320, 1.0
          %v337 = vadd.f32 %v321, 1.0
          %v338 = vadd.f32 %v322, 1.0
          %v339 = vadd.f32 %v323, 1.0
          %v340 = vadd.f32 %v324, 1.0
          %v341 = vadd.f32 %v325, 1.0
          %v342 = vadd.f32 %v326, 1.0
          %v343 = vadd.f32 %v327, 1.0
          %v344 = vadd.f32 %v328, 1.0
          %v345 = vadd.f32 %v329, 1.0
          %v346 = vadd.f32 %v330, 1.0
          %v347 = vadd.f32 %v331, 1.0
          %v348 = vadd.f32 %v332, 1.0
          %v349 = vmax.f32 %v333, 1.0
          %v350 = vmax.f32 %v334, 1.0
          %v351 = vmax.f32 %v335, 1.0
          %v352 = vmax.f32 %v336, 1.0
          %v353 = vmax.f32 %v337, 1.0
          %v354 = vmax.f32 %v338, 1.0
          %v355 = vmax.f32 %v339, 1.0
          %v356 = vmax.f32 %v340, 1.0
          %v357 = vmax.f32 %v341, 1.0
          %v358 = vmax.f32 %v342, 1.0
          %v359 = vmax.f32 %v343, 1.0
          %v360 = vmax.f32 %v344, 1.0
          %v361 = vmax.f32 %v345, 1.0
          %v362 = vmax.f32 %v346, 1.0
          %v363 = vmax.f32 %v347, 1.0
          %v364 = vmax.f32 %v348, 1.0
          %v365 = vld [vmem:[%s170] sm:$0x1]
          %v366 = vld [vmem:[%s176] sm:$0xff]
          %v367 = vld [vmem:[%s176 + $0x8] sm:$0xff]
          %v368 = vld [vmem:[%s176 + $0x10] sm:$0xff]
          %v369 = vld [vmem:[%s176 + $0x18] sm:$0xff]
          %v370 = vld [vmem:[%s176 + $0x20] sm:$0xff]
          %v371 = vld [vmem:[%s176 + $0x28] sm:$0xff]
          %v372 = vld [vmem:[%s176 + $0x30] sm:$0xff]
          %v373 = vld [vmem:[%s176 + $0x38] sm:$0xff]
          %v374 = vld [vmem:[%s176 + $0x40] sm:$0xff]
          %v375 = vld [vmem:[%s176 + $0x48] sm:$0xff]
          %v376 = vld [vmem:[%s176 + $0x50] sm:$0xff]
          %v377 = vld [vmem:[%s176 + $0x58] sm:$0xff]
          %v378 = vld [vmem:[%s176 + $0x60] sm:$0xff]
          %v379 = vld [vmem:[%s176 + $0x68] sm:$0xff]
          %v380 = vld [vmem:[%s176 + $0x70] sm:$0xff]
          %v381 = vld [vmem:[%s176 + $0x78] sm:$0xff]
          %v383 = vperm.slane %v365, 0
          %386 = vset.pattern.permute.xlu0 0
          %387 = vperm.xlu0 %386, %v366
          %v388 = vpop.permute.xlu0 %387
          %391 = vset.pattern.permute.xlu0 0
          %392 = vperm.xlu0 %391, %v367
          %v393 = vpop.permute.xlu0 %392
          %396 = vset.pattern.permute.xlu0 0
          %397 = vperm.xlu0 %396, %v368
          %v398 = vpop.permute.xlu0 %397
          %401 = vset.pattern.permute.xlu0 0
          %402 = vperm.xlu0 %401, %v369
          %v403 = vpop.permute.xlu0 %402
          %406 = vset.pattern.permute.xlu0 0
          %407 = vperm.xlu0 %406, %v370
          %v408 = vpop.permute.xlu0 %407
          %411 = vset.pattern.permute.xlu0 0
          %412 = vperm.xlu0 %411, %v371
          %v413 = vpop.permute.xlu0 %412
          %416 = vset.pattern.permute.xlu0 0
          %417 = vperm.xlu0 %416, %v372
          %v418 = vpop.permute.xlu0 %417
          %421 = vset.pattern.permute.xlu0 0
          %422 = vperm.xlu0 %421, %v373
          %v423 = vpop.permute.xlu0 %422
          %426 = vset.pattern.permute.xlu0 0
          %427 = vperm.xlu0 %426, %v374
          %v428 = vpop.permute.xlu0 %427
          %431 = vset.pattern.permute.xlu0 0
          %432 = vperm.xlu0 %431, %v375
          %v433 = vpop.permute.xlu0 %432
          %436 = vset.pattern.permute.xlu0 0
          %437 = vperm.xlu0 %436, %v376
          %v438 = vpop.permute.xlu0 %437
          %441 = vset.pattern.permute.xlu0 0
          %442 = vperm.xlu0 %441, %v377
          %v443 = vpop.permute.xlu0 %442
          %446 = vset.pattern.permute.xlu0 0
          %447 = vperm.xlu0 %446, %v378
          %v448 = vpop.permute.xlu0 %447
          %451 = vset.pattern.permute.xlu0 0
          %452 = vperm.xlu0 %451, %v379
          %v453 = vpop.permute.xlu0 %452
          %456 = vset.pattern.permute.xlu0 0
          %457 = vperm.xlu0 %456, %v380
          %v458 = vpop.permute.xlu0 %457
          %461 = vset.pattern.permute.xlu0 0
          %462 = vperm.xlu0 %461, %v381
          %v463 = vpop.permute.xlu0 %462
          %v465 = vsub.f32 %v383, %v388
          %v466 = vsub.f32 %v383, %v393
          %v467 = vsub.f32 %v383, %v398
          %v468 = vsub.f32 %v383, %v403
          %v469 = vsub.f32 %v383, %v408
          %v470 = vsub.f32 %v383, %v413
          %v471 = vsub.f32 %v383, %v418
          %v472 = vsub.f32 %v383, %v423
          %v473 = vsub.f32 %v383, %v428
          %v474 = vsub.f32 %v383, %v433
          %v475 = vsub.f32 %v383, %v438
          %v476 = vsub.f32 %v383, %v443
          %v477 = vsub.f32 %v383, %v448
          %v478 = vsub.f32 %v383, %v453
          %v479 = vsub.f32 %v383, %v458
          %v480 = vsub.f32 %v383, %v463
          %v481 = vrcp.pop %v349
          %v482 = vrcp.pop %v350
          %v483 = vrcp.pop %v351
          %v484 = vrcp.pop %v352
          %v485 = vrcp.pop %v353
          %v486 = vrcp.pop %v354
          %v487 = vrcp.pop %v355
          %v488 = vrcp.pop %v356
          %v489 = vrcp.pop %v357
          %v490 = vrcp.pop %v358
          %v491 = vrcp.pop %v359
          %v492 = vrcp.pop %v360
          %v493 = vrcp.pop %v361
          %v494 = vrcp.pop %v362
          %v495 = vrcp.pop %v363
          %v496 = vrcp.pop %v364
          %v497 = vmul.f32 %v465, %v481
          %v498 = vmul.f32 %v466, %v482
          %v499 = vmul.f32 %v467, %v483
          %v500 = vmul.f32 %v468, %v484
          %v501 = vmul.f32 %v469, %v485
          %v502 = vmul.f32 %v470, %v486
          %v503 = vmul.f32 %v471, %v487
          %v504 = vmul.f32 %v472, %v488
          %v505 = vmul.f32 %v473, %v489
          %v506 = vmul.f32 %v474, %v490
          %v507 = vmul.f32 %v475, %v491
          %v508 = vmul.f32 %v476, %v492
          %v509 = vmul.f32 %v477, %v493
          %v510 = vmul.f32 %v478, %v494
          %v511 = vmul.f32 %v479, %v495
          %v512 = vmul.f32 %v480, %v496
          %v513 = vsub.f32 %v301, %v497
          %v514 = vsub.f32 %v302, %v498
          %v515 = vsub.f32 %v303, %v499
          %v516 = vsub.f32 %v304, %v500
          %v517 = vsub.f32 %v305, %v501
          %v518 = vsub.f32 %v306, %v502
          %v519 = vsub.f32 %v307, %v503
          %v520 = vsub.f32 %v308, %v504
          %v521 = vsub.f32 %v309, %v505
          %v522 = vsub.f32 %v310, %v506
          %v523 = vsub.f32 %v311, %v507
          %v524 = vsub.f32 %v312, %v508
          %v525 = vsub.f32 %v313, %v509
          %v526 = vsub.f32 %v314, %v510
          %v527 = vsub.f32 %v315, %v511
          %v528 = vsub.f32 %v316, %v512
          %529 = vrot.lane.b32.xlu0 %v513, 127
          %v530 = vpop.permute.xlu0 %529
          %531 = vrot.lane.b32.xlu0 %v514, 127
          %v532 = vpop.permute.xlu0 %531
          %533 = vrot.lane.b32.xlu0 %v515, 127
          %v534 = vpop.permute.xlu0 %533
          %535 = vrot.lane.b32.xlu0 %v516, 127
          %v536 = vpop.permute.xlu0 %535
          %537 = vrot.lane.b32.xlu0 %v517, 127
          %v538 = vpop.permute.xlu0 %537
          %539 = vrot.lane.b32.xlu0 %v518, 127
          %v540 = vpop.permute.xlu0 %539
          %541 = vrot.lane.b32.xlu0 %v519, 127
          %v542 = vpop.permute.xlu0 %541
          %543 = vrot.lane.b32.xlu0 %v520, 127
          %v544 = vpop.permute.xlu0 %543
          %545 = vrot.lane.b32.xlu0 %v521, 127
          %v546 = vpop.permute.xlu0 %545
          %547 = vrot.lane.b32.xlu0 %v522, 127
          %v548 = vpop.permute.xlu0 %547
          %549 = vrot.lane.b32.xlu0 %v523, 127
          %v550 = vpop.permute.xlu0 %549
          %551 = vrot.lane.b32.xlu0 %v524, 127
          %v552 = vpop.permute.xlu0 %551
          %553 = vrot.lane.b32.xlu0 %v525, 127
          %v554 = vpop.permute.xlu0 %553
          %555 = vrot.lane.b32.xlu0 %v526, 127
          %v556 = vpop.permute.xlu0 %555
          %557 = vrot.lane.b32.xlu0 %v527, 127
          %v558 = vpop.permute.xlu0 %557
          %559 = vrot.lane.b32.xlu0 %v528, 127
          %v560 = vpop.permute.xlu0 %559
          %v561 = vadd.s32 %v215, 1
          %vm562 = vcmp.lt.s32.totalorder %v561, 128
          %v563 = vsel %vm562, 1, 0
          %vm564 = vcmp.eq.s32.totalorder %v563, 1
          %v565 = vsel %vm564, %v530, -inf
          %v566 = vsel %vm564, %v532, -inf
          %v567 = vsel %vm564, %v534, -inf
          %v568 = vsel %vm564, %v536, -inf
          %v569 = vsel %vm564, %v538, -inf
          %v570 = vsel %vm564, %v540, -inf
          %v571 = vsel %vm564, %v542, -inf
          %v572 = vsel %vm564, %v544, -inf
          %v573 = vsel %vm564, %v546, -inf
          %v574 = vsel %vm564, %v548, -inf
          %v575 = vsel %vm564, %v550, -inf
          %v576 = vsel %vm564, %v552, -inf
          %v577 = vsel %vm564, %v554, -inf
          %v578 = vsel %vm564, %v556, -inf
          %v579 = vsel %vm564, %v558, -inf
          %v580 = vsel %vm564, %v560, -inf
          %v581 = vmax.f32 %v513, %v565
          %v582 = vmax.f32 %v514, %v566
          %v583 = vmax.f32 %v515, %v567
          %v584 = vmax.f32 %v516, %v568
          %v585 = vmax.f32 %v517, %v569
          %v586 = vmax.f32 %v518, %v570
          %v587 = vmax.f32 %v519, %v571
          %v588 = vmax.f32 %v520, %v572
          %v589 = vmax.f32 %v521, %v573
          %v590 = vmax.f32 %v522, %v574
          %v591 = vmax.f32 %v523, %v575
          %v592 = vmax.f32 %v524, %v576
          %v593 = vmax.f32 %v525, %v577
          %v594 = vmax.f32 %v526, %v578
          %v595 = vmax.f32 %v527, %v579
          %v596 = vmax.f32 %v528, %v580
          %597 = vrot.lane.b32.xlu0 %v581, 126
          %v598 = vpop.permute.xlu0 %597
          %599 = vrot.lane.b32.xlu0 %v582, 126
          %v600 = vpop.permute.xlu0 %599
          %601 = vrot.lane.b32.xlu0 %v583, 126
          %v602 = vpop.permute.xlu0 %601
          %603 = vrot.lane.b32.xlu0 %v584, 126
          %v604 = vpop.permute.xlu0 %603
          %605 = vrot.lane.b32.xlu0 %v585, 126
          %v606 = vpop.permute.xlu0 %605
          %607 = vrot.lane.b32.xlu0 %v586, 126
          %v608 = vpop.permute.xlu0 %607
          %609 = vrot.lane.b32.xlu0 %v587, 126
          %v610 = vpop.permute.xlu0 %609
          %611 = vrot.lane.b32.xlu0 %v588, 126
          %v612 = vpop.permute.xlu0 %611
          %613 = vrot.lane.b32.xlu0 %v589, 126
          %v614 = vpop.permute.xlu0 %613
          %615 = vrot.lane.b32.xlu0 %v590, 126
          %v616 = vpop.permute.xlu0 %615
          %617 = vrot.lane.b32.xlu0 %v591, 126
          %v618 = vpop.permute.xlu0 %617
          %619 = vrot.lane.b32.xlu0 %v592, 126
          %v620 = vpop.permute.xlu0 %619
          %621 = vrot.lane.b32.xlu0 %v593, 126
          %v622 = vpop.permute.xlu0 %621
          %623 = vrot.lane.b32.xlu0 %v594, 126
          %v624 = vpop.permute.xlu0 %623
          %625 = vrot.lane.b32.xlu0 %v595, 126
          %v626 = vpop.permute.xlu0 %625
          %627 = vrot.lane.b32.xlu0 %v596, 126
          %v628 = vpop.permute.xlu0 %627
          %v629 = vadd.s32 %v215, 2
          %vm630 = vcmp.lt.s32.totalorder %v629, 128
          %v631 = vsel %vm630, 1, 0
          %vm632 = vcmp.eq.s32.totalorder %v631, 1
          %v633 = vsel %vm632, %v598, -inf
          %v634 = vsel %vm632, %v600, -inf
          %v635 = vsel %vm632, %v602, -inf
          %v636 = vsel %vm632, %v604, -inf
          %v637 = vsel %vm632, %v606, -inf
          %v638 = vsel %vm632, %v608, -inf
          %v639 = vsel %vm632, %v610, -inf
          %v640 = vsel %vm632, %v612, -inf
          %v641 = vsel %vm632, %v614, -inf
          %v642 = vsel %vm632, %v616, -inf
          %v643 = vsel %vm632, %v618, -inf
          %v644 = vsel %vm632, %v620, -inf
          %v645 = vsel %vm632, %v622, -inf
          %v646 = vsel %vm632, %v624, -inf
          %v647 = vsel %vm632, %v626, -inf
          %v648 = vsel %vm632, %v628, -inf
          %v649 = vmax.f32 %v581, %v633
          %v650 = vmax.f32 %v582, %v634
          %v651 = vmax.f32 %v583, %v635
          %v652 = vmax.f32 %v584, %v636
          %v653 = vmax.f32 %v585, %v637
          %v654 = vmax.f32 %v586, %v638
          %v655 = vmax.f32 %v587, %v639
          %v656 = vmax.f32 %v588, %v640
          %v657 = vmax.f32 %v589, %v641
          %v658 = vmax.f32 %v590, %v642
          %v659 = vmax.f32 %v591, %v643
          %v660 = vmax.f32 %v592, %v644
          %v661 = vmax.f32 %v593, %v645
          %v662 = vmax.f32 %v594, %v646
          %v663 = vmax.f32 %v595, %v647
          %v664 = vmax.f32 %v596, %v648
          %665 = vrot.lane.b32.xlu0 %v649, 124
          %v666 = vpop.permute.xlu0 %665
          %667 = vrot.lane.b32.xlu0 %v650, 124
          %v668 = vpop.permute.xlu0 %667
          %669 = vrot.lane.b32.xlu0 %v651, 124
          %v670 = vpop.permute.xlu0 %669
          %671 = vrot.lane.b32.xlu0 %v652, 124
          %v672 = vpop.permute.xlu0 %671
          %673 = vrot.lane.b32.xlu0 %v653, 124
          %v674 = vpop.permute.xlu0 %673
          %675 = vrot.lane.b32.xlu0 %v654, 124
          %v676 = vpop.permute.xlu0 %675
          %677 = vrot.lane.b32.xlu0 %v655, 124
          %v678 = vpop.permute.xlu0 %677
          %679 = vrot.lane.b32.xlu0 %v656, 124
          %v680 = vpop.permute.xlu0 %679
          %681 = vrot.lane.b32.xlu0 %v657, 124
          %v682 = vpop.permute.xlu0 %681
          %683 = vrot.lane.b32.xlu0 %v658, 124
          %v684 = vpop.permute.xlu0 %683
          %685 = vrot.lane.b32.xlu0 %v659, 124
          %v686 = vpop.permute.xlu0 %685
          %687 = vrot.lane.b32.xlu0 %v660, 124
          %v688 = vpop.permute.xlu0 %687
          %689 = vrot.lane.b32.xlu0 %v661, 124
          %v690 = vpop.permute.xlu0 %689
          %691 = vrot.lane.b32.xlu0 %v662, 124
          %v692 = vpop.permute.xlu0 %691
          %693 = vrot.lane.b32.xlu0 %v663, 124
          %v694 = vpop.permute.xlu0 %693
          %695 = vrot.lane.b32.xlu0 %v664, 124
          %v696 = vpop.permute.xlu0 %695
          %v697 = vadd.s32 %v215, 4
          %vm698 = vcmp.lt.s32.totalorder %v697, 128
          %v699 = vsel %vm698, 1, 0
          %vm700 = vcmp.eq.s32.totalorder %v699, 1
          %v701 = vsel %vm700, %v666, -inf
          %v702 = vsel %vm700, %v668, -inf
          %v703 = vsel %vm700, %v670, -inf
          %v704 = vsel %vm700, %v672, -inf
          %v705 = vsel %vm700, %v674, -inf
          %v706 = vsel %vm700, %v676, -inf
          %v707 = vsel %vm700, %v678, -inf
          %v708 = vsel %vm700, %v680, -inf
          %v709 = vsel %vm700, %v682, -inf
          %v710 = vsel %vm700, %v684, -inf
          %v711 = vsel %vm700, %v686, -inf
          %v712 = vsel %vm700, %v688, -inf
          %v713 = vsel %vm700, %v690, -inf
          %v714 = vsel %vm700, %v692, -inf
          %v715 = vsel %vm700, %v694, -inf
          %v716 = vsel %vm700, %v696, -inf
          %v717 = vmax.f32 %v649, %v701
          %v718 = vmax.f32 %v650, %v702
          %v719 = vmax.f32 %v651, %v703
          %v720 = vmax.f32 %v652, %v704
          %v721 = vmax.f32 %v653, %v705
          %v722 = vmax.f32 %v654, %v706
          %v723 = vmax.f32 %v655, %v707
          %v724 = vmax.f32 %v656, %v708
          %v725 = vmax.f32 %v657, %v709
          %v726 = vmax.f32 %v658, %v710
          %v727 = vmax.f32 %v659, %v711
          %v728 = vmax.f32 %v660, %v712
          %v729 = vmax.f32 %v661, %v713
          %v730 = vmax.f32 %v662, %v714
          %v731 = vmax.f32 %v663, %v715
          %v732 = vmax.f32 %v664, %v716
          %733 = vrot.lane.b32.xlu0 %v717, 120
          %v734 = vpop.permute.xlu0 %733
          %735 = vrot.lane.b32.xlu0 %v718, 120
          %v736 = vpop.permute.xlu0 %735
          %737 = vrot.lane.b32.xlu0 %v719, 120
          %v738 = vpop.permute.xlu0 %737
          %739 = vrot.lane.b32.xlu0 %v720, 120
          %v740 = vpop.permute.xlu0 %739
          %741 = vrot.lane.b32.xlu0 %v721, 120
          %v742 = vpop.permute.xlu0 %741
          %743 = vrot.lane.b32.xlu0 %v722, 120
          %v744 = vpop.permute.xlu0 %743
          %745 = vrot.lane.b32.xlu0 %v723, 120
          %v746 = vpop.permute.xlu0 %745
          %747 = vrot.lane.b32.xlu0 %v724, 120
          %v748 = vpop.permute.xlu0 %747
          %749 = vrot.lane.b32.xlu0 %v725, 120
          %v750 = vpop.permute.xlu0 %749
          %751 = vrot.lane.b32.xlu0 %v726, 120
          %v752 = vpop.permute.xlu0 %751
          %753 = vrot.lane.b32.xlu0 %v727, 120
          %v754 = vpop.permute.xlu0 %753
          %755 = vrot.lane.b32.xlu0 %v728, 120
          %v756 = vpop.permute.xlu0 %755
          %757 = vrot.lane.b32.xlu0 %v729, 120
          %v758 = vpop.permute.xlu0 %757
          %759 = vrot.lane.b32.xlu0 %v730, 120
          %v760 = vpop.permute.xlu0 %759
          %761 = vrot.lane.b32.xlu0 %v731, 120
          %v762 = vpop.permute.xlu0 %761
          %763 = vrot.lane.b32.xlu0 %v732, 120
          %v764 = vpop.permute.xlu0 %763
          %v765 = vadd.s32 %v215, 8
          %vm766 = vcmp.lt.s32.totalorder %v765, 128
          %v767 = vsel %vm766, 1, 0
          %vm768 = vcmp.eq.s32.totalorder %v767, 1
          %v769 = vsel %vm768, %v734, -inf
          %v770 = vsel %vm768, %v736, -inf
          %v771 = vsel %vm768, %v738, -inf
          %v772 = vsel %vm768, %v740, -inf
          %v773 = vsel %vm768, %v742, -inf
          %v774 = vsel %vm768, %v744, -inf
          %v775 = vsel %vm768, %v746, -inf
          %v776 = vsel %vm768, %v748, -inf
          %v777 = vsel %vm768, %v750, -inf
          %v778 = vsel %vm768, %v752, -inf
          %v779 = vsel %vm768, %v754, -inf
          %v780 = vsel %vm768, %v756, -inf
          %v781 = vsel %vm768, %v758, -inf
          %v782 = vsel %vm768, %v760, -inf
          %v783 = vsel %vm768, %v762, -inf
          %v784 = vsel %vm768, %v764, -inf
          %v785 = vmax.f32 %v717, %v769
          %v786 = vmax.f32 %v718, %v770
          %v787 = vmax.f32 %v719, %v771
          %v788 = vmax.f32 %v720, %v772
          %v789 = vmax.f32 %v721, %v773
          %v790 = vmax.f32 %v722, %v774
          %v791 = vmax.f32 %v723, %v775
          %v792 = vmax.f32 %v724, %v776
          %v793 = vmax.f32 %v725, %v777
          %v794 = vmax.f32 %v726, %v778
          %v795 = vmax.f32 %v727, %v779
          %v796 = vmax.f32 %v728, %v780
          %v797 = vmax.f32 %v729, %v781
          %v798 = vmax.f32 %v730, %v782
          %v799 = vmax.f32 %v731, %v783
          %v800 = vmax.f32 %v732, %v784
          %801 = vrot.lane.b32.xlu0 %v785, 112
          %v802 = vpop.permute.xlu0 %801
          %803 = vrot.lane.b32.xlu0 %v786, 112
          %v804 = vpop.permute.xlu0 %803
          %805 = vrot.lane.b32.xlu0 %v787, 112
          %v806 = vpop.permute.xlu0 %805
          %807 = vrot.lane.b32.xlu0 %v788, 112
          %v808 = vpop.permute.xlu0 %807
          %809 = vrot.lane.b32.xlu0 %v789, 112
          %v810 = vpop.permute.xlu0 %809
          %811 = vrot.lane.b32.xlu0 %v790, 112
          %v812 = vpop.permute.xlu0 %811
          %813 = vrot.lane.b32.xlu0 %v791, 112
          %v814 = vpop.permute.xlu0 %813
          %815 = vrot.lane.b32.xlu0 %v792, 112
          %v816 = vpop.permute.xlu0 %815
          %817 = vrot.lane.b32.xlu0 %v793, 112
          %v818 = vpop.permute.xlu0 %817
          %819 = vrot.lane.b32.xlu0 %v794, 112
          %v820 = vpop.permute.xlu0 %819
          %821 = vrot.lane.b32.xlu0 %v795, 112
          %v822 = vpop.permute.xlu0 %821
          %823 = vrot.lane.b32.xlu0 %v796, 112
          %v824 = vpop.permute.xlu0 %823
          %825 = vrot.lane.b32.xlu0 %v797, 112
          %v826 = vpop.permute.xlu0 %825
          %827 = vrot.lane.b32.xlu0 %v798, 112
          %v828 = vpop.permute.xlu0 %827
          %829 = vrot.lane.b32.xlu0 %v799, 112
          %v830 = vpop.permute.xlu0 %829
          %831 = vrot.lane.b32.xlu0 %v800, 112
          %v832 = vpop.permute.xlu0 %831
          %v833 = vadd.s32 %v215, 16
          %vm834 = vcmp.lt.s32.totalorder %v833, 128
          %v835 = vsel %vm834, 1, 0
          %vm836 = vcmp.eq.s32.totalorder %v835, 1
          %v837 = vsel %vm836, %v802, -inf
          %v838 = vsel %vm836, %v804, -inf
          %v839 = vsel %vm836, %v806, -inf
          %v840 = vsel %vm836, %v808, -inf
          %v841 = vsel %vm836, %v810, -inf
          %v842 = vsel %vm836, %v812, -inf
          %v843 = vsel %vm836, %v814, -inf
          %v844 = vsel %vm836, %v816, -inf
          %v845 = vsel %vm836, %v818, -inf
          %v846 = vsel %vm836, %v820, -inf
          %v847 = vsel %vm836, %v822, -inf
          %v848 = vsel %vm836, %v824, -inf
          %v849 = vsel %vm836, %v826, -inf
          %v850 = vsel %vm836, %v828, -inf
          %v851 = vsel %vm836, %v830, -inf
          %v852 = vsel %vm836, %v832, -inf
          %v853 = vmax.f32 %v785, %v837
          %v854 = vmax.f32 %v786, %v838
          %v855 = vmax.f32 %v787, %v839
          %v856 = vmax.f32 %v788, %v840
          %v857 = vmax.f32 %v789, %v841
          %v858 = vmax.f32 %v790, %v842
          %v859 = vmax.f32 %v791, %v843
          %v860 = vmax.f32 %v792, %v844
          %v861 = vmax.f32 %v793, %v845
          %v862 = vmax.f32 %v794, %v846
          %v863 = vmax.f32 %v795, %v847
          %v864 = vmax.f32 %v796, %v848
          %v865 = vmax.f32 %v797, %v849
          %v866 = vmax.f32 %v798, %v850
          %v867 = vmax.f32 %v799, %v851
          %v868 = vmax.f32 %v800, %v852
          %869 = vrot.lane.b32.xlu0 %v853, 96
          %v870 = vpop.permute.xlu0 %869
          %871 = vrot.lane.b32.xlu0 %v854, 96
          %v872 = vpop.permute.xlu0 %871
          %873 = vrot.lane.b32.xlu0 %v855, 96
          %v874 = vpop.permute.xlu0 %873
          %875 = vrot.lane.b32.xlu0 %v856, 96
          %v876 = vpop.permute.xlu0 %875
          %877 = vrot.lane.b32.xlu0 %v857, 96
          %v878 = vpop.permute.xlu0 %877
          %879 = vrot.lane.b32.xlu0 %v858, 96
          %v880 = vpop.permute.xlu0 %879
          %881 = vrot.lane.b32.xlu0 %v859, 96
          %v882 = vpop.permute.xlu0 %881
          %883 = vrot.lane.b32.xlu0 %v860, 96
          %v884 = vpop.permute.xlu0 %883
          %885 = vrot.lane.b32.xlu0 %v861, 96
          %v886 = vpop.permute.xlu0 %885
          %887 = vrot.lane.b32.xlu0 %v862, 96
          %v888 = vpop.permute.xlu0 %887
          %889 = vrot.lane.b32.xlu0 %v863, 96
          %v890 = vpop.permute.xlu0 %889
          %891 = vrot.lane.b32.xlu0 %v864, 96
          %v892 = vpop.permute.xlu0 %891
          %893 = vrot.lane.b32.xlu0 %v865, 96
          %v894 = vpop.permute.xlu0 %893
          %895 = vrot.lane.b32.xlu0 %v866, 96
          %v896 = vpop.permute.xlu0 %895
          %897 = vrot.lane.b32.xlu0 %v867, 96
          %v898 = vpop.permute.xlu0 %897
          %899 = vrot.lane.b32.xlu0 %v868, 96
          %v900 = vpop.permute.xlu0 %899
          %v901 = vadd.s32 %v215, 32
          %vm902 = vcmp.lt.s32.totalorder %v901, 128
          %v903 = vsel %vm902, 1, 0
          %vm904 = vcmp.eq.s32.totalorder %v903, 1
          %v905 = vsel %vm904, %v870, -inf
          %v906 = vsel %vm904, %v872, -inf
          %v907 = vsel %vm904, %v874, -inf
          %v908 = vsel %vm904, %v876, -inf
          %v909 = vsel %vm904, %v878, -inf
          %v910 = vsel %vm904, %v880, -inf
          %v911 = vsel %vm904, %v882, -inf
          %v912 = vsel %vm904, %v884, -inf
          %v913 = vsel %vm904, %v886, -inf
          %v914 = vsel %vm904, %v888, -inf
          %v915 = vsel %vm904, %v890, -inf
          %v916 = vsel %vm904, %v892, -inf
          %v917 = vsel %vm904, %v894, -inf
          %v918 = vsel %vm904, %v896, -inf
          %v919 = vsel %vm904, %v898, -inf
          %v920 = vsel %vm904, %v900, -inf
          %v921 = vmax.f32 %v853, %v905
          %v922 = vmax.f32 %v854, %v906
          %v923 = vmax.f32 %v855, %v907
          %v924 = vmax.f32 %v856, %v908
          %v925 = vmax.f32 %v857, %v909
          %v926 = vmax.f32 %v858, %v910
          %v927 = vmax.f32 %v859, %v911
          %v928 = vmax.f32 %v860, %v912
          %v929 = vmax.f32 %v861, %v913
          %v930 = vmax.f32 %v862, %v914
          %v931 = vmax.f32 %v863, %v915
          %v932 = vmax.f32 %v864, %v916
          %v933 = vmax.f32 %v865, %v917
          %v934 = vmax.f32 %v866, %v918
          %v935 = vmax.f32 %v867, %v919
          %v936 = vmax.f32 %v868, %v920
          %937 = vrot.lane.b32.xlu0 %v921, 64
          %v938 = vpop.permute.xlu0 %937
          %939 = vrot.lane.b32.xlu0 %v922, 64
          %v940 = vpop.permute.xlu0 %939
          %941 = vrot.lane.b32.xlu0 %v923, 64
          %v942 = vpop.permute.xlu0 %941
          %943 = vrot.lane.b32.xlu0 %v924, 64
          %v944 = vpop.permute.xlu0 %943
          %945 = vrot.lane.b32.xlu0 %v925, 64
          %v946 = vpop.permute.xlu0 %945
          %947 = vrot.lane.b32.xlu0 %v926, 64
          %v948 = vpop.permute.xlu0 %947
          %949 = vrot.lane.b32.xlu0 %v927, 64
          %v950 = vpop.permute.xlu0 %949
          %951 = vrot.lane.b32.xlu0 %v928, 64
          %v952 = vpop.permute.xlu0 %951
          %953 = vrot.lane.b32.xlu0 %v929, 64
          %v954 = vpop.permute.xlu0 %953
          %955 = vrot.lane.b32.xlu0 %v930, 64
          %v956 = vpop.permute.xlu0 %955
          %957 = vrot.lane.b32.xlu0 %v931, 64
          %v958 = vpop.permute.xlu0 %957
          %959 = vrot.lane.b32.xlu0 %v932, 64
          %v960 = vpop.permute.xlu0 %959
          %961 = vrot.lane.b32.xlu0 %v933, 64
          %v962 = vpop.permute.xlu0 %961
          %963 = vrot.lane.b32.xlu0 %v934, 64
          %v964 = vpop.permute.xlu0 %963
          %965 = vrot.lane.b32.xlu0 %v935, 64
          %v966 = vpop.permute.xlu0 %965
          %967 = vrot.lane.b32.xlu0 %v936, 64
          %v968 = vpop.permute.xlu0 %967
          %v969 = vadd.s32 %v215, 64
          %vm970 = vcmp.lt.s32.totalorder %v969, 128
          %v971 = vsel %vm970, 1, 0
          %vm972 = vcmp.eq.s32.totalorder %v971, 1
          %v973 = vsel %vm972, %v938, -inf
          %v974 = vsel %vm972, %v940, -inf
          %v975 = vsel %vm972, %v942, -inf
          %v976 = vsel %vm972, %v944, -inf
          %v977 = vsel %vm972, %v946, -inf
          %v978 = vsel %vm972, %v948, -inf
          %v979 = vsel %vm972, %v950, -inf
          %v980 = vsel %vm972, %v952, -inf
          %v981 = vsel %vm972, %v954, -inf
          %v982 = vsel %vm972, %v956, -inf
          %v983 = vsel %vm972, %v958, -inf
          %v984 = vsel %vm972, %v960, -inf
          %v985 = vsel %vm972, %v962, -inf
          %v986 = vsel %vm972, %v964, -inf
          %v987 = vsel %vm972, %v966, -inf
          %v988 = vsel %vm972, %v968, -inf
          %v989 = vmax.f32 %v921, %v973
          %v990 = vmax.f32 %v922, %v974
          %v991 = vmax.f32 %v923, %v975
          %v992 = vmax.f32 %v924, %v976
          %v993 = vmax.f32 %v925, %v977
          %v994 = vmax.f32 %v926, %v978
          %v995 = vmax.f32 %v927, %v979
          %v996 = vmax.f32 %v928, %v980
          %v997 = vmax.f32 %v929, %v981
          %v998 = vmax.f32 %v930, %v982
          %v999 = vmax.f32 %v931, %v983
          %v1000 = vmax.f32 %v932, %v984
          %v1001 = vmax.f32 %v933, %v985
          %v1002 = vmax.f32 %v934, %v986
          %v1003 = vmax.f32 %v935, %v987
          %v1004 = vmax.f32 %v936, %v988
          %s1005 = scalar_lea.vmem [#allocation2], %s179
          %v1006 = vld [vmem:[%s1005] sm:$0xff]
          %v1007 = vld [vmem:[%s1005 + $0x8] sm:$0xff]
          %v1008 = vld [vmem:[%s1005 + $0x10] sm:$0xff]
          %v1009 = vld [vmem:[%s1005 + $0x18] sm:$0xff]
          %v1010 = vld [vmem:[%s1005 + $0x20] sm:$0xff]
          %v1011 = vld [vmem:[%s1005 + $0x28] sm:$0xff]
          %v1012 = vld [vmem:[%s1005 + $0x30] sm:$0xff]
          %v1013 = vld [vmem:[%s1005 + $0x38] sm:$0xff]
          %v1014 = vld [vmem:[%s1005 + $0x40] sm:$0xff]
          %v1015 = vld [vmem:[%s1005 + $0x48] sm:$0xff]
          %v1016 = vld [vmem:[%s1005 + $0x50] sm:$0xff]
          %v1017 = vld [vmem:[%s1005 + $0x58] sm:$0xff]
          %v1018 = vld [vmem:[%s1005 + $0x60] sm:$0xff]
          %v1019 = vld [vmem:[%s1005 + $0x68] sm:$0xff]
          %v1020 = vld [vmem:[%s1005 + $0x70] sm:$0xff]
          %v1021 = vld [vmem:[%s1005 + $0x78] sm:$0xff]
          %1023 = vset.pattern.permute.xlu0 0
          %1024 = vperm.xlu0 %1023, %v1006
          %v1025 = vpop.permute.xlu0 %1024
          %1028 = vset.pattern.permute.xlu0 0
          %1029 = vperm.xlu0 %1028, %v1007
          %v1030 = vpop.permute.xlu0 %1029
          %1033 = vset.pattern.permute.xlu0 0
          %1034 = vperm.xlu0 %1033, %v1008
          %v1035 = vpop.permute.xlu0 %1034
          %1038 = vset.pattern.permute.xlu0 0
          %1039 = vperm.xlu0 %1038, %v1009
          %v1040 = vpop.permute.xlu0 %1039
          %1043 = vset.pattern.permute.xlu0 0
          %1044 = vperm.xlu0 %1043, %v1010
          %v1045 = vpop.permute.xlu0 %1044
          %1048 = vset.pattern.permute.xlu0 0
          %1049 = vperm.xlu0 %1048, %v1011
          %v1050 = vpop.permute.xlu0 %1049
          %1053 = vset.pattern.permute.xlu0 0
          %1054 = vperm.xlu0 %1053, %v1012
          %v1055 = vpop.permute.xlu0 %1054
          %1058 = vset.pattern.permute.xlu0 0
          %1059 = vperm.xlu0 %1058, %v1013
          %v1060 = vpop.permute.xlu0 %1059
          %1063 = vset.pattern.permute.xlu0 0
          %1064 = vperm.xlu0 %1063, %v1014
          %v1065 = vpop.permute.xlu0 %1064
          %1068 = vset.pattern.permute.xlu0 0
          %1069 = vperm.xlu0 %1068, %v1015
          %v1070 = vpop.permute.xlu0 %1069
          %1073 = vset.pattern.permute.xlu0 0
          %1074 = vperm.xlu0 %1073, %v1016
          %v1075 = vpop.permute.xlu0 %1074
          %1078 = vset.pattern.permute.xlu0 0
          %1079 = vperm.xlu0 %1078, %v1017
          %v1080 = vpop.permute.xlu0 %1079
          %1083 = vset.pattern.permute.xlu0 0
          %1084 = vperm.xlu0 %1083, %v1018
          %v1085 = vpop.permute.xlu0 %1084
          %1088 = vset.pattern.permute.xlu0 0
          %1089 = vperm.xlu0 %1088, %v1019
          %v1090 = vpop.permute.xlu0 %1089
          %1093 = vset.pattern.permute.xlu0 0
          %1094 = vperm.xlu0 %1093, %v1020
          %v1095 = vpop.permute.xlu0 %1094
          %1098 = vset.pattern.permute.xlu0 0
          %1099 = vperm.xlu0 %1098, %v1021
          %v1100 = vpop.permute.xlu0 %1099
          %v1102 = vmax.f32 %v989, %v1025
          %v1103 = vmax.f32 %v990, %v1030
          %v1104 = vmax.f32 %v991, %v1035
          %v1105 = vmax.f32 %v992, %v1040
          %v1106 = vmax.f32 %v993, %v1045
          %v1107 = vmax.f32 %v994, %v1050
          %v1108 = vmax.f32 %v995, %v1055
          %v1109 = vmax.f32 %v996, %v1060
          %v1110 = vmax.f32 %v997, %v1065
          %v1111 = vmax.f32 %v998, %v1070
          %v1112 = vmax.f32 %v999, %v1075
          %v1113 = vmax.f32 %v1000, %v1080
          %v1114 = vmax.f32 %v1001, %v1085
          %v1115 = vmax.f32 %v1002, %v1090
          %v1116 = vmax.f32 %v1003, %v1095
          %v1117 = vmax.f32 %v1004, %v1100
          %1118 = vmax.xlane.f32.xlu0 %v1102
          %v1119 = vpop.xlane.xlu0 %1118
          %1120 = vmax.xlane.f32.xlu0 %v1103
          %v1121 = vpop.xlane.xlu0 %1120
          %1122 = vmax.xlane.f32.xlu0 %v1104
          %v1123 = vpop.xlane.xlu0 %1122
          %1124 = vmax.xlane.f32.xlu0 %v1105
          %v1125 = vpop.xlane.xlu0 %1124
          %1126 = vmax.xlane.f32.xlu0 %v1106
          %v1127 = vpop.xlane.xlu0 %1126
          %1128 = vmax.xlane.f32.xlu0 %v1107
          %v1129 = vpop.xlane.xlu0 %1128
          %1130 = vmax.xlane.f32.xlu0 %v1108
          %v1131 = vpop.xlane.xlu0 %1130
          %1132 = vmax.xlane.f32.xlu0 %v1109
          %v1133 = vpop.xlane.xlu0 %1132
          %1134 = vmax.xlane.f32.xlu0 %v1110
          %v1135 = vpop.xlane.xlu0 %1134
          %1136 = vmax.xlane.f32.xlu0 %v1111
          %v1137 = vpop.xlane.xlu0 %1136
          %1138 = vmax.xlane.f32.xlu0 %v1112
          %v1139 = vpop.xlane.xlu0 %1138
          %1140 = vmax.xlane.f32.xlu0 %v1113
          %v1141 = vpop.xlane.xlu0 %1140
          %1142 = vmax.xlane.f32.xlu0 %v1114
          %v1143 = vpop.xlane.xlu0 %1142
          %1144 = vmax.xlane.f32.xlu0 %v1115
          %v1145 = vpop.xlane.xlu0 %1144
          %1146 = vmax.xlane.f32.xlu0 %v1116
          %v1147 = vpop.xlane.xlu0 %1146
          %1148 = vmax.xlane.f32.xlu0 %v1117
          %v1149 = vpop.xlane.xlu0 %1148
          %vm1150 = vcmask 7168
          %1151 = vst.msk [vmem:[%s1005] sm:$0xff] %vm1150, %v1119
          %1152 = vst.msk [vmem:[%s1005 + $0x8] sm:$0xff] %vm1150, %v1121
          %1153 = vst.msk [vmem:[%s1005 + $0x10] sm:$0xff] %vm1150, %v1123
          %1154 = vst.msk [vmem:[%s1005 + $0x18] sm:$0xff] %vm1150, %v1125
          %1155 = vst.msk [vmem:[%s1005 + $0x20] sm:$0xff] %vm1150, %v1127
          %1156 = vst.msk [vmem:[%s1005 + $0x28] sm:$0xff] %vm1150, %v1129
          %1157 = vst.msk [vmem:[%s1005 + $0x30] sm:$0xff] %vm1150, %v1131
          %1158 = vst.msk [vmem:[%s1005 + $0x38] sm:$0xff] %vm1150, %v1133
          %1159 = vst.msk [vmem:[%s1005 + $0x40] sm:$0xff] %vm1150, %v1135
          %1160 = vst.msk [vmem:[%s1005 + $0x48] sm:$0xff] %vm1150, %v1137
          %1161 = vst.msk [vmem:[%s1005 + $0x50] sm:$0xff] %vm1150, %v1139
          %1162 = vst.msk [vmem:[%s1005 + $0x58] sm:$0xff] %vm1150, %v1141
          %1163 = vst.msk [vmem:[%s1005 + $0x60] sm:$0xff] %vm1150, %v1143
          %1164 = vst.msk [vmem:[%s1005 + $0x68] sm:$0xff] %vm1150, %v1145
          %1165 = vst.msk [vmem:[%s1005 + $0x70] sm:$0xff] %vm1150, %v1147
          %1166 = vst.msk [vmem:[%s1005 + $0x78] sm:$0xff] %vm1150, %v1149
          %vm1167 = vcmp.le.s32.totalorder %v236, %v217
          %vm1168 = vcmp.le.s32.totalorder %v237, %v217
          %vm1169 = vcmp.le.s32.totalorder %v238, %v217
          %vm1170 = vcmp.le.s32.totalorder %v239, %v217
          %vm1171 = vcmp.le.s32.totalorder %v240, %v217
          %vm1172 = vcmp.le.s32.totalorder %v241, %v217
          %vm1173 = vcmp.le.s32.totalorder %v242, %v217
          %vm1174 = vcmp.le.s32.totalorder %v243, %v217
          %vm1175 = vcmp.le.s32.totalorder %v244, %v217
          %vm1176 = vcmp.le.s32.totalorder %v245, %v217
          %vm1177 = vcmp.le.s32.totalorder %v246, %v217
          %vm1178 = vcmp.le.s32.totalorder %v247, %v217
          %vm1179 = vcmp.le.s32.totalorder %v248, %v217
          %vm1180 = vcmp.le.s32.totalorder %v249, %v217
          %vm1181 = vcmp.le.s32.totalorder %v250, %v217
          %vm1182 = vcmp.le.s32.totalorder %v251, %v217
          %v1183 = vsel %vm1167, %v1102, inf
          %v1184 = vsel %vm1168, %v1103, inf
          %v1185 = vsel %vm1169, %v1104, inf
          %v1186 = vsel %vm1170, %v1105, inf
          %v1187 = vsel %vm1171, %v1106, inf
          %v1188 = vsel %vm1172, %v1107, inf
          %v1189 = vsel %vm1173, %v1108, inf
          %v1190 = vsel %vm1174, %v1109, inf
          %v1191 = vsel %vm1175, %v1110, inf
          %v1192 = vsel %vm1176, %v1111, inf
          %v1193 = vsel %vm1177, %v1112, inf
          %v1194 = vsel %vm1178, %v1113, inf
          %v1195 = vsel %vm1179, %v1114, inf
          %v1196 = vsel %vm1180, %v1115, inf
          %v1197 = vsel %vm1181, %v1116, inf
          %v1198 = vsel %vm1182, %v1117, inf
          %v1199 = vmin.f32 %v1183, %v1187
          %v1200 = vmin.f32 %v1184, %v1188
          %v1201 = vmin.f32 %v1185, %v1189
          %v1202 = vmin.f32 %v1186, %v1190
          %v1203 = vmin.f32 %v1199, %v1191
          %v1204 = vmin.f32 %v1200, %v1192
          %v1205 = vmin.f32 %v1201, %v1193
          %v1206 = vmin.f32 %v1202, %v1194
          %v1207 = vmin.f32 %v1203, %v1195
          %v1208 = vmin.f32 %v1204, %v1196
          %v1209 = vmin.f32 %v1205, %v1197
          %v1210 = vmin.f32 %v1206, %v1198
          %v1211 = vmin.f32 %v1207, %v1208
          %v1212 = vmin.f32 %v1209, %v1210
          %v1213 = vmin.f32 %v1211, %v1212
          %v1214 = vrot.slane %v1213, 4
          %v1215 = vmin.f32 %v1213, %v1214
          %v1216 = vrot.slane %v1215, 2
          %v1217 = vmin.f32 %v1215, %v1216
          %v1218 = vrot.slane %v1217, 1
          %v1219 = vmin.f32 %v1217, %v1218
          %v1220 = vld [vmem:[%s166] sm:$0x1]
          %v1221 = vmin.f32 %v1220, %v1219
          %1222 = vst [vmem:[%s166] sm:$0x1] %v1221
        $region40: #{tpu_custom_call.1} parent=27 // pred_fallthru
          _
        %s1223 = sand.u32 %s92, 1
        %s1224 = scalar_lea.sflag [#allocation4], %s1223
        %s1225 = sand.u32 %s92, 1
        %s1226 = scalar_lea.vmem [#allocation3], %s1225
        // Predicated region
        $region41: #{tpu_custom_call.1} parent=27 // pred_check
          %p1227 = pneg %p102
        $region42: #{tpu_custom_call.1} parent=27 // pred_check_branch
          %1229 = sbr.rel (%p1227) target = $region44
        $region43: #{tpu_custom_call.1} parent=27 // pred_region
          %s1230 = ssub.s32 3, %s20
          %1232 = vsyncadd %s1224, 0
          %s1233 = scalar_lea.hbm %s2, %s1230
          %s1235 = sshll.u32 %s1226, 4
          %s1236 = int_to_ptr.vmem [resolvable:$true] %s1235
          %s1237 = sshll.u32 %s1233, 4
          %s1238 = int_to_ptr.hbm [resolvable:$true] %s1237
          %1240 = dma.vmem_to_hbm [thread:$0]  %s1236, 16, %s1238, %s1224
        $region44: #{tpu_custom_call.1} parent=27 // pred_fallthru
          _
      $region28: #{tpu_custom_call.1} parent=5 // pred_fallthru
        _
      %p1241 = scmp.le.s32.totalorder 2, %s11
      // Predicated region
      $region45: #{tpu_custom_call.1} parent=5 // pred_check
        %p1242 = pneg %p1241
      $region46: #{tpu_custom_call.1} parent=5 // pred_check_branch
        %1244 = sbr.rel (%p1242) target = $region48
      $region47: #{tpu_custom_call.1} parent=5 // pred_region
        %s1245 = ssub.s32 %s11, 2
        // Predicated region
        $region49: #{tpu_custom_call.1} parent=47 // pred_check
          %p1246 = pneg %p108
        $region50: #{tpu_custom_call.1} parent=47 // pred_check_branch
          %1248 = sbr.rel (%p1246) target = $region52
        $region51: #{tpu_custom_call.1} parent=47 // pred_region
          %s1249 = sand.u32 %s93, 1
          %s1250 = scalar_lea.sflag [#allocation4], %s1249
          %s1251 = sand.u32 %s93, 1
          %s1252 = scalar_lea.vmem [#allocation3], %s1251
          %1254 = dma.done %s1250, 16
        $region52: #{tpu_custom_call.1} parent=47 // pred_fallthru
          _
      $region48: #{tpu_custom_call.1} parent=5 // pred_fallthru
        _
    $region6: #{tpu_custom_call.1} parent=1 // loop_footer
      %s15 = sadd.s32 1, %s11
    $region7: #{tpu_custom_call.1} parent=1 // loop_footer_branch
      %10 = sbr.rel target = $region3
    $region8: #{tpu_custom_call.1} parent=1 // loop_exit
      _
    %1255 = vsyncpa [#allocation4], 1
    %s1256 = scalar_lea.sflag [#allocation4], 1
    %1257 = vsyncpa %s1256, 1

</llo_original>
